<compile_context>
chip_gen: v7x
topology: tpu7x:2x2x1
jax: 0.10.0
libtpu: 0.0.40
codegen_flags: <defaults>
</compile_context>

<pallas_src>
import math
import functools

import jax
import jax.numpy as jnp
from jax.experimental import pallas as pl
from jax.experimental.pallas import tpu as pltpu


# --------------------------------------------------------------------------------------
# Kernel A: fused QKV projection + per-head RMSNorm + RoPE
# --------------------------------------------------------------------------------------
def _qkv_rope_kernel(x_ref, wqkv_ref, cosq_ref, sinq_ref, cosk_ref, sink_ref,
                     rotq_ref, rotk_ref, msq_ref, msk_ref, qln_ref, kln_ref,
                     q_out_ref, k_out_ref, v_out_ref,
                     *, d_q, d_kv, eps, compute_dtype):
    x = x_ref[0].astype(compute_dtype)                                   # (TS, H)

    # One fused projection: (TS, H) @ (H, d_q + 2*d_kv), f32 accumulation.
    qkv = jnp.dot(x, wqkv_ref[...], preferred_element_type=jnp.float32)
    q = qkv[:, :d_q]
    k = qkv[:, d_q:d_q + d_kv]
    v = qkv[:, d_q + d_kv:]

    def _norm_rope(h, ms_mat, w_ln, rot, cos, sin):
        # Per-head mean of squares via block matmul (keeps lanes dense).
        ms = jnp.dot(h * h, ms_mat, preferred_element_type=jnp.float32)  # (TS, D)
        hn = h * jax.lax.rsqrt(ms + eps) * w_ln                          # f32 RMSNorm
        # rotate_half as a signed block-diagonal permutation on the MXU.
        hr = jnp.dot(hn.astype(compute_dtype), rot,
                     preferred_element_type=jnp.float32)
        return hn * cos + hr * sin

    q_out = _norm_rope(q, msq_ref[...], qln_ref[...], rotq_ref[...],
                       cosq_ref[...], sinq_ref[...])
    k_out = _norm_rope(k, msk_ref[...], kln_ref[...], rotk_ref[...],
                       cosk_ref[...], sink_ref[...])

    q_out_ref[0] = q_out.astype(q_out_ref.dtype)
    k_out_ref[0] = k_out.astype(k_out_ref.dtype)
    v_out_ref[0] = v.astype(v_out_ref.dtype)


# --------------------------------------------------------------------------------------
# Kernel B: sliding-window flash attention (online softmax) + fused o_proj
# --------------------------------------------------------------------------------------
def _flash_attn_o_kernel(q_ref, k_ref, v_ref, wo_ref, o_ref,
                         acc_ref, m_ref, l_ref,
                         *, num_kv_heads, n_rep, head_dim, q_tile, kv_tile,
                         window, windowed, compute_dtype):
    qi = pl.program_id(1)
    ki = pl.program_id(2)

    lo_blk = jnp.maximum(0, qi * q_tile - window + 1) // kv_tile
    hi_blk = ((qi + 1) * q_tile - 1) // kv_tile
    blk = lo_blk + ki                                    # actual kv block for this step

    @pl.when(ki == 0)
    def _init():
        acc_ref[...] = jnp.zeros_like(acc_ref)
        m_ref[...] = jnp.full_like(m_ref, -1e30)
        l_ref[...] = jnp.zeros_like(l_ref)

    @pl.when(blk <= hi_blk)
    def _compute():
        q = q_ref[0]                                     # (nkv, n_rep, TQ, hd)
        k = k_ref[0]                                     # (nkv, TK, hd)
        v = v_ref[0]                                     # (nkv, TK, hd)

        # Per-tile causal + sliding-window mask (no (T,T) mask anywhere).
        i = qi * q_tile + jax.lax.broadcasted_iota(jnp.int32, (q_tile, kv_tile), 0)
        j = blk * kv_tile + jax.lax.broadcasted_iota(jnp.int32, (q_tile, kv_tile), 1)
        allowed = j <= i
        if windowed:
            allowed = jnp.logical_and(allowed, (i - j) < window)
        mask_tile = allowed.astype(jnp.float32)                       # (TQ, TK)
        mask = jnp.concatenate([mask_tile] * n_rep, axis=0)           # (n_rep*TQ, TK)
        neg = (mask - 1.0) * 1e30                                     # 0 or -1e30

        for g in range(num_kv_heads):
            qg = q[g].reshape(n_rep * q_tile, head_dim)               # rows = r*TQ + t
            kg = k[g]                                                 # (TK, hd)
            vg = v[g]

            s = jax.lax.dot_general(qg, kg, (((1,), (1,)), ((), ())),
                                    preferred_element_type=jnp.float32)
            s = s + neg                                               # finite masking

            m_prev = m_ref[g]                                         # (n_rep*TQ, 1)
            m_new = jnp.maximum(m_prev, jnp.max(s, axis=-1, keepdims=True))
            alpha = jnp.exp(m_prev - m_new)
            p = jnp.exp(s - m_new) * mask                             # zero masked cols

            l_ref[g] = alpha * l_ref[g] + jnp.sum(p, axis=-1, keepdims=True)
            pv = jax.lax.dot_general(p.astype(compute_dtype), vg,
                                     (((1,), (0,)), ((), ())),
                                     preferred_element_type=jnp.float32)
            acc_ref[g] = alpha * acc_ref[g] + pv
            m_ref[g] = m_new

    @pl.when(ki == pl.num_programs(2) - 1)
    def _finalize():
        out = jnp.zeros(o_ref.shape[1:], dtype=jnp.float32)           # (TQ, H)
        for g in range(num_kv_heads):
            l = l_ref[g]
            if compute_dtype == jnp.float32:
                inv_l = 1.0 / l
            else:
                inv_l = pl.reciprocal(l, approx=True)                 # EUP, ~free
            attn_g = (acc_ref[g] * inv_l).astype(compute_dtype)       # (n_rep*TQ, hd)
            for r in range(n_rep):
                h = g * n_rep + r
                out = out + jnp.dot(
                    attn_g[r * q_tile:(r + 1) * q_tile, :],
                    wo_ref[pl.ds(h * head_dim, head_dim), :],
                    preferred_element_type=jnp.float32)
        o_ref[0] = out.astype(o_ref.dtype)


# --------------------------------------------------------------------------------------
# Wrapper
# --------------------------------------------------------------------------------------
def spacebyte_attention(x, params, *, num_heads, num_kv_heads, head_dim, eps,
                        attention_window, rope_theta,
                        compute_dtype=jnp.bfloat16,
                        seq_tile=128, q_tile=128, kv_tile=128,
                        vmem_limit_bytes=48 * 1024 * 1024):
    B, T, H = x.shape
    assert num_heads % num_kv_heads == 0, "num_heads must be a multiple of num_kv_heads"
    n_rep = num_heads // num_kv_heads
    d_q = num_heads * head_dim
    d_kv = num_kv_heads * head_dim

    ts = min(seq_tile, T)
    tq = min(q_tile, T)
    tk = min(kv_tile, T)
    assert T % ts == 0 and T % tq == 0 and T % tk == 0
    assert ts % 8 == 0 and tq % 8 == 0 and tk % 8 == 0

    windowed = attention_window is not None and attention_window < T
    window_eff = int(attention_window) if windowed else T

    f32 = jnp.float32

    # ---- rotary cache (tiled per-head; 1/sqrt(hd) score scale folded into Q's cos/sin)
    inv_freq = 1.0 / (rope_theta ** (jnp.arange(0, head_dim, 2, dtype=f32) / head_dim))
    freqs = jnp.outer(jnp.arange(T, dtype=f32), inv_freq)
    emb = jnp.concatenate((freqs, freqs), axis=-1)                    # (T, hd)
    cos, sin = jnp.cos(emb), jnp.sin(emb)
    scale = 1.0 / math.sqrt(head_dim)
    cos_q = jnp.tile(cos, (1, num_heads)) * scale                     # (T, d_q)
    sin_q = jnp.tile(sin, (1, num_heads)) * scale
    cos_k = jnp.tile(cos, (1, num_kv_heads))                          # (T, d_kv)
    sin_k = jnp.tile(sin, (1, num_kv_heads))

    # ---- rotate_half as block-diagonal signed permutation (MXU-friendly)
    half = head_dim // 2
    idx = jnp.arange(half)
    r = jnp.zeros((head_dim, head_dim), f32)
    r = r.at[idx + half, idx].set(-1.0)
    r = r.at[idx, idx + half].set(1.0)
    rot_q = jnp.kron(jnp.eye(num_heads, dtype=f32), r).astype(compute_dtype)
    rot_k = jnp.kron(jnp.eye(num_kv_heads, dtype=f32), r).astype(compute_dtype)

    # ---- per-head mean-of-squares as block matmul (no 64-lane slicing in-kernel)
    ms_q = jnp.kron(jnp.eye(num_heads, dtype=f32),
                    jnp.full((head_dim, head_dim), 1.0 / head_dim, f32))
    ms_k = jnp.kron(jnp.eye(num_kv_heads, dtype=f32),
                    jnp.full((head_dim, head_dim), 1.0 / head_dim, f32))

    qln_full = jnp.tile(params["qln"].reshape(1, head_dim).astype(f32), (1, num_heads))
    kln_full = jnp.tile(params["kln"].reshape(1, head_dim).astype(f32), (1, num_kv_heads))

    wqkv = jnp.concatenate([params["wq"], params["wk"], params["wv"]],
                           axis=1).astype(compute_dtype)
    wo = params["wo"].astype(compute_dtype)

    # ---------------- Kernel A: QKV + RMSNorm + RoPE ----------------
    nseq = T // ts
    qkv_kernel = functools.partial(_qkv_rope_kernel, d_q=d_q, d_kv=d_kv, eps=eps,
                                   compute_dtype=compute_dtype)
    q_all, k_all, v_all = pl.pallas_call(
        qkv_kernel,
        out_shape=(jax.ShapeDtypeStruct((B, T, d_q), compute_dtype),
                   jax.ShapeDtypeStruct((B, T, d_kv), compute_dtype),
                   jax.ShapeDtypeStruct((B, T, d_kv), compute_dtype)),
        grid=(B, nseq),
        in_specs=[
            pl.BlockSpec((1, ts, H), lambda b, s: (b, s, 0)),          # x
            pl.BlockSpec((H, d_q + 2 * d_kv), lambda b, s: (0, 0)),    # fused W_qkv
            pl.BlockSpec((ts, d_q), lambda b, s: (s, 0)),              # cos_q
            pl.BlockSpec((ts, d_q), lambda b, s: (s, 0)),              # sin_q
            pl.BlockSpec((ts, d_kv), lambda b, s: (s, 0)),             # cos_k
            pl.BlockSpec((ts, d_kv), lambda b, s: (s, 0)),             # sin_k
            pl.BlockSpec((d_q, d_q), lambda b, s: (0, 0)),             # rot_q
            pl.BlockSpec((d_kv, d_kv), lambda b, s: (0, 0)),           # rot_k
            pl.BlockSpec((d_q, d_q), lambda b, s: (0, 0)),             # ms_q
            pl.BlockSpec((d_kv, d_kv), lambda b, s: (0, 0)),           # ms_k
            pl.BlockSpec((1, d_q), lambda b, s: (0, 0)),               # qln (tiled)
            pl.BlockSpec((1, d_kv), lambda b, s: (0, 0)),              # kln (tiled)
        ],
        out_specs=(
            pl.BlockSpec((1, ts, d_q), lambda b, s: (b, s, 0)),
            pl.BlockSpec((1, ts, d_kv), lambda b, s: (b, s, 0)),
            pl.BlockSpec((1, ts, d_kv), lambda b, s: (b, s, 0)),
        ),
        compiler_params=pltpu.CompilerParams(
            dimension_semantics=("parallel", "parallel"),
            vmem_limit_bytes=vmem_limit_bytes),
    )(x, wqkv, cos_q, sin_q, cos_k, sin_k, rot_q, rot_k, ms_q, ms_k,
      qln_full, kln_full)

    # Layout plumbing (cheap XLA glue): heads become leading axes so the attention
    # kernel only does plain 2-D MXU dots (no in-kernel lane relayouts).
    q5 = q_all.reshape(B, T, num_kv_heads, n_rep, head_dim).transpose(0, 2, 3, 1, 4)
    k4 = k_all.reshape(B, T, num_kv_heads, head_dim).transpose(0, 2, 1, 3)
    v4 = v_all.reshape(B, T, num_kv_heads, head_dim).transpose(0, 2, 1, 3)

    # ---------------- Kernel B: windowed flash attention + o_proj ----------------
    nq = T // tq
    nk_steps = 0
    for qblk in range(nq):
        lo = max(0, qblk * tq - window_eff + 1) // tk
        hi = ((qblk + 1) * tq - 1) // tk
        nk_steps = max(nk_steps, hi - lo + 1)

    def kv_index(b, qi, ki):
        lo = jnp.maximum(0, qi * tq - window_eff + 1) // tk
        hi = ((qi + 1) * tq - 1) // tk
        return (b, 0, jnp.minimum(lo + ki, hi), 0)

    attn_kernel = functools.partial(
        _flash_attn_o_kernel,
        num_kv_heads=num_kv_heads, n_rep=n_rep, head_dim=head_dim,
        q_tile=tq, kv_tile=tk, window=window_eff, windowed=windowed,
        compute_dtype=compute_dtype)

    out = pl.pallas_call(
        attn_kernel,
        out_shape=jax.ShapeDtypeStruct((B, T, H), x.dtype),
        grid=(B, nq, nk_steps),
        in_specs=[
            pl.BlockSpec((1, num_kv_heads, n_rep, tq, head_dim),
                         lambda b, qi, ki: (b, 0, 0, qi, 0)),          # q
            pl.BlockSpec((1, num_kv_heads, tk, head_dim), kv_index),   # k
            pl.BlockSpec((1, num_kv_heads, tk, head_dim), kv_index),   # v
            pl.BlockSpec((d_q, H), lambda b, qi, ki: (0, 0)),          # wo
        ],
        out_specs=pl.BlockSpec((1, tq, H), lambda b, qi, ki: (b, qi, 0)),
        scratch_shapes=[
            pltpu.VMEM((num_kv_heads, n_rep * tq, head_dim), jnp.float32),  # acc
            pltpu.VMEM((num_kv_heads, n_rep * tq, 1), jnp.float32),         # m
            pltpu.VMEM((num_kv_heads, n_rep * tq, 1), jnp.float32),         # l
        ],
        compiler_params=pltpu.CompilerParams(
            dimension_semantics=("parallel", "parallel", "arbitrary"),
            vmem_limit_bytes=vmem_limit_bytes),
    )(q5, k4, v4, wo)
    return out


# --------------------------------------------------------------------------------------
# Pure-JAX reference (mirrors the PyTorch SpaceByteAttention forward)
# --------------------------------------------------------------------------------------
def spacebyte_attention_ref(x, params, *, num_heads, num_kv_heads, head_dim,
                            eps, attention_window, rope_theta):
    B, T, H = x.shape
    q = x @ params["wq"]
    k = x @ params["wk"]
    v = x @ params["wv"]

    def rms(h, w):
        var = jnp.mean(h * h, axis=-1, keepdims=True)
        return w.reshape(-1) * (h * jax.lax.rsqrt(var + eps))

    q = rms(q.reshape(B, T, num_heads, head_dim), params["qln"]).transpose(0, 2, 1, 3)
    k = rms(k.reshape(B, T, num_kv_heads, head_dim), params["kln"]).transpose(0, 2, 1, 3)
    v = v.reshape(B, T, num_kv_heads, head_dim).transpose(0, 2, 1, 3)

    inv_freq = 1.0 / (rope_theta ** (jnp.arange(0, head_dim, 2, dtype=jnp.float32)
                                     / head_dim))
    freqs = jnp.outer(jnp.arange(T, dtype=jnp.float32), inv_freq)
    emb = jnp.concatenate((freqs, freqs), axis=-1)
    cos, sin = jnp.cos(emb)[None, None], jnp.sin(emb)[None, None]

    def rot(z):
        half = z.shape[-1] // 2
        return jnp.concatenate((-z[..., half:], z[..., :half]), axis=-1)

    q = q * cos + rot(q) * sin
    k = k * cos + rot(k) * sin

    n_rep = num_heads // num_kv_heads
    k = jnp.repeat(k, n_rep, axis=1)
    v = jnp.repeat(v, n_rep, axis=1)

    attn = jnp.einsum("bhqd,bhkd->bhqk", q, k) / math.sqrt(head_dim)
    attn = attn + jnp.triu(jnp.full((T, T), -jnp.inf), k=1)
    if attention_window is not None and attention_window < T:
        wmask = (jnp.triu(jnp.full((T, T), -jnp.inf), k=attention_window)
                 + jnp.tril(jnp.full((T, T), -jnp.inf), k=-attention_window))
        attn = attn + wmask
    attn = jax.nn.softmax(attn.astype(jnp.float32), axis=-1).astype(x.dtype)
    out = jnp.einsum("bhqk,bhkd->bhqd", attn, v)
    out = out.transpose(0, 2, 1, 3).reshape(B, T, num_heads * head_dim)
    return out @ params["wo"]


# --------------------------------------------------------------------------------------
if __name__ == "__main__":
    # Config mirrors SpaceByteAttention.__init__ with hidden_size=128:
    hidden_size = 128
    head_dim = 64
    num_heads = max(1, hidden_size // head_dim)          # 2
    num_kv_heads = max(1, num_heads // 3)                # 1  -> GQA, n_rep = 2
    norm_eps = 1e-6
    rope_theta = 10000.0
    attention_window = 96                                # < seq_len -> sliding window
    B, T = 2, 256

    key = jax.random.PRNGKey(0)
    k_x, k_q, k_k, k_v, k_o, k_qln, k_kln = jax.random.split(key, 7)

    x = jax.random.normal(k_x, (B, T, hidden_size), dtype=jnp.float32)
    params = {
        # weights stored as (in, out) so y = x @ W
        "wq": 0.02 * jax.random.normal(k_q, (hidden_size, num_heads * head_dim),
                                       jnp.float32),
        "wk": 0.02 * jax.random.normal(k_k, (hidden_size, num_kv_heads * head_dim),
                                       jnp.float32),
        "wv": 0.02 * jax.random.normal(k_v, (hidden_size, num_kv_heads * head_dim),
                                       jnp.float32),
        "wo": 0.02 * jax.random.normal(k_o, (num_heads * head_dim, hidden_size),
                                       jnp.float32),
        "qln": 1.0 + 0.1 * jax.random.normal(k_qln, (head_dim,), jnp.float32),
        "kln": 1.0 + 0.1 * jax.random.normal(k_kln, (head_dim,), jnp.float32),
    }

    kwargs = dict(num_heads=num_heads, num_kv_heads=num_kv_heads, head_dim=head_dim,
                  eps=norm_eps, attention_window=attention_window,
                  rope_theta=rope_theta)

    ref = jax.block_until_ready(spacebyte_attention_ref(x, params, **kwargs))

    # 1) f32 path: tight correctness check of the tiled / online-softmax kernels.
    out_f32 = spacebyte_attention(x, params, compute_dtype=jnp.float32,
                                  seq_tile=64, q_tile=64, kv_tile=64, **kwargs)
    out_f32 = jax.block_until_ready(out_f32)
    assert out_f32.shape == (B, T, hidden_size)
    err32 = float(jnp.max(jnp.abs(out_f32 - ref)))
    assert jnp.allclose(out_f32, ref, atol=5e-3, rtol=5e-3), \
        f"f32 kernel mismatch, max abs diff {err32}"

    # 2) bf16 path: MXU-friendly operands (the configuration you would run for perf).
    out_bf16 = spacebyte_attention(x, params, compute_dtype=jnp.bfloat16,
                                   seq_tile=64, q_tile=64, kv_tile=64, **kwargs)
    out_bf16 = jax.block_until_ready(out_bf16)
    err16 = float(jnp.max(jnp.abs(out_bf16 - ref)))
    assert jnp.allclose(out_bf16, ref, atol=5e-2, rtol=5e-2), \
        f"bf16 kernel mismatch, max abs diff {err16}"

    print("KERNEL_OK")
</pallas_src>

<mosaic_0001>
module attributes {stable_mosaic.version = 11 : i64} {
  func.func @_qkv_rope_kernel(%arg0: i32, %arg1: i32, %arg2: memref<1x64x128xf32, #tpu.memory_space<vmem>>, %arg3: memref<128x256xf32, #tpu.memory_space<vmem>>, %arg4: memref<64x128xf32, #tpu.memory_space<vmem>>, %arg5: memref<64x128xf32, #tpu.memory_space<vmem>>, %arg6: memref<64x64xf32, #tpu.memory_space<vmem>>, %arg7: memref<64x64xf32, #tpu.memory_space<vmem>>, %arg8: memref<128x128xf32, #tpu.memory_space<vmem>>, %arg9: memref<64x64xf32, #tpu.memory_space<vmem>>, %arg10: memref<128x128xf32, #tpu.memory_space<vmem>>, %arg11: memref<64x64xf32, #tpu.memory_space<vmem>>, %arg12: memref<1x128xf32, #tpu.memory_space<vmem>>, %arg13: memref<1x64xf32, #tpu.memory_space<vmem>>, %arg14: memref<1x64x128xf32, #tpu.memory_space<vmem>>, %arg15: memref<1x64x64xf32, #tpu.memory_space<vmem>>, %arg16: memref<1x64x64xf32, #tpu.memory_space<vmem>>) attributes {dimension_semantics = [#tpu.dimension_semantics<parallel>, #tpu.dimension_semantics<parallel>], iteration_bounds = array<i64: 2, 4>, scalar_prefetch = 0 : i64, scratch_operands = 0 : i64, tpu.core_type = #tpu.core_type<tc>, window_params = [{transform_indices = @transform_0, window_bounds = array<i64: 1, 64, 128>}, {pipeline_mode = #tpu.pipeline_mode<synchronous>, transform_indices = @transform_1, window_bounds = array<i64: 128, 256>}, {transform_indices = @transform_2, window_bounds = array<i64: 64, 128>}, {transform_indices = @transform_3, window_bounds = array<i64: 64, 128>}, {transform_indices = @transform_4, window_bounds = array<i64: 64, 64>}, {transform_indices = @transform_5, window_bounds = array<i64: 64, 64>}, {pipeline_mode = #tpu.pipeline_mode<synchronous>, transform_indices = @transform_6, window_bounds = array<i64: 128, 128>}, {pipeline_mode = #tpu.pipeline_mode<synchronous>, transform_indices = @transform_7, window_bounds = array<i64: 64, 64>}, {pipeline_mode = #tpu.pipeline_mode<synchronous>, transform_indices = @transform_8, window_bounds = array<i64: 128, 128>}, {pipeline_mode = #tpu.pipeline_mode<synchronous>, transform_indices = @transform_9, window_bounds = array<i64: 64, 64>}, {pipeline_mode = #tpu.pipeline_mode<synchronous>, transform_indices = @transform_10, window_bounds = array<i64: 1, 128>}, {pipeline_mode = #tpu.pipeline_mode<synchronous>, transform_indices = @transform_11, window_bounds = array<i64: 1, 64>}, {transform_indices = @transform_12, window_bounds = array<i64: 1, 64, 128>}, {transform_indices = @transform_13, window_bounds = array<i64: 1, 64, 64>}, {transform_indices = @transform_14, window_bounds = array<i64: 1, 64, 64>}]} {
    %c0 = arith.constant 0 : index
    %c0_0 = arith.constant 0 : index
    %c0_1 = arith.constant 0 : index
    %0 = vector.load %arg2[%c0, %c0_0, %c0_1] : memref<1x64x128xf32, #tpu.memory_space<vmem>>, vector<1x64x128xf32>
    %1 = vector.shape_cast %0 : vector<1x64x128xf32> to vector<64x128xf32>
    %c0_2 = arith.constant 0 : index
    %c0_3 = arith.constant 0 : index
    %2 = vector.load %arg3[%c0_2, %c0_3] : memref<128x256xf32, #tpu.memory_space<vmem>>, vector<128x256xf32>
    %cst = arith.constant dense<0.000000e+00> : vector<64x256xf32>
    %3 = tpu.matmul %1, %2, %cst {dimension_numbers = #tpu.dot_dimension_numbers<[1], [0], [0], [1], [0, 0, 1, 1], [], []>} : vector<64x128xf32>, vector<128x256xf32>, vector<64x256xf32> -> vector<64x256xf32>
    %4 = vector.extract_strided_slice %3 {offsets = [0, 0], sizes = [64, 128], strides = [1, 1]} : vector<64x256xf32> to vector<64x128xf32>
    %5 = vector.extract_strided_slice %3 {offsets = [0, 128], sizes = [64, 64], strides = [1, 1]} : vector<64x256xf32> to vector<64x64xf32>
    %6 = vector.extract_strided_slice %3 {offsets = [0, 192], sizes = [64, 64], strides = [1, 1]} : vector<64x256xf32> to vector<64x64xf32>
    %c0_4 = arith.constant 0 : index
    %c0_5 = arith.constant 0 : index
    %7 = vector.load %arg10[%c0_4, %c0_5] : memref<128x128xf32, #tpu.memory_space<vmem>>, vector<128x128xf32>
    %c0_6 = arith.constant 0 : index
    %c0_7 = arith.constant 0 : index
    %8 = vector.load %arg12[%c0_6, %c0_7] : memref<1x128xf32, #tpu.memory_space<vmem>>, vector<1x128xf32>
    %c0_8 = arith.constant 0 : index
    %c0_9 = arith.constant 0 : index
    %9 = vector.load %arg8[%c0_8, %c0_9] : memref<128x128xf32, #tpu.memory_space<vmem>>, vector<128x128xf32>
    %c0_10 = arith.constant 0 : index
    %c0_11 = arith.constant 0 : index
    %10 = vector.load %arg4[%c0_10, %c0_11] : memref<64x128xf32, #tpu.memory_space<vmem>>, vector<64x128xf32>
    %c0_12 = arith.constant 0 : index
    %c0_13 = arith.constant 0 : index
    %11 = vector.load %arg5[%c0_12, %c0_13] : memref<64x128xf32, #tpu.memory_space<vmem>>, vector<64x128xf32>
    %12 = arith.mulf %4, %4 : vector<64x128xf32>
    %cst_14 = arith.constant dense<0.000000e+00> : vector<64x128xf32>
    %13 = tpu.matmul %12, %7, %cst_14 {dimension_numbers = #tpu.dot_dimension_numbers<[1], [0], [0], [1], [0, 0, 1, 1], [], []>} : vector<64x128xf32>, vector<128x128xf32>, vector<64x128xf32> -> vector<64x128xf32>
    %cst_15 = arith.constant 9.99999997E-7 : f32
    %14 = vector.broadcast %cst_15 : f32 to vector<64x128xf32>
    %15 = arith.addf %13, %14 : vector<64x128xf32>
    %16 = math.rsqrt %15 : vector<64x128xf32>
    %17 = arith.mulf %4, %16 : vector<64x128xf32>
    %18 = vector.broadcast %8 : vector<1x128xf32> to vector<64x128xf32>
    %19 = arith.mulf %17, %18 : vector<64x128xf32>
    %cst_16 = arith.constant dense<0.000000e+00> : vector<64x128xf32>
    %20 = tpu.matmul %19, %9, %cst_16 {dimension_numbers = #tpu.dot_dimension_numbers<[1], [0], [0], [1], [0, 0, 1, 1], [], []>} : vector<64x128xf32>, vector<128x128xf32>, vector<64x128xf32> -> vector<64x128xf32>
    %21 = arith.mulf %19, %10 : vector<64x128xf32>
    %22 = arith.mulf %20, %11 : vector<64x128xf32>
    %23 = arith.addf %21, %22 : vector<64x128xf32>
    %c0_17 = arith.constant 0 : index
    %c0_18 = arith.constant 0 : index
    %24 = vector.load %arg11[%c0_17, %c0_18] : memref<64x64xf32, #tpu.memory_space<vmem>>, vector<64x64xf32>
    %c0_19 = arith.constant 0 : index
    %c0_20 = arith.constant 0 : index
    %25 = vector.load %arg13[%c0_19, %c0_20] : memref<1x64xf32, #tpu.memory_space<vmem>>, vector<1x64xf32>
    %c0_21 = arith.constant 0 : index
    %c0_22 = arith.constant 0 : index
    %26 = vector.load %arg9[%c0_21, %c0_22] : memref<64x64xf32, #tpu.memory_space<vmem>>, vector<64x64xf32>
    %c0_23 = arith.constant 0 : index
    %c0_24 = arith.constant 0 : index
    %27 = vector.load %arg6[%c0_23, %c0_24] : memref<64x64xf32, #tpu.memory_space<vmem>>, vector<64x64xf32>
    %c0_25 = arith.constant 0 : index
    %c0_26 = arith.constant 0 : index
    %28 = vector.load %arg7[%c0_25, %c0_26] : memref<64x64xf32, #tpu.memory_space<vmem>>, vector<64x64xf32>
    %29 = arith.mulf %5, %5 : vector<64x64xf32>
    %cst_27 = arith.constant dense<0.000000e+00> : vector<64x64xf32>
    %30 = tpu.matmul %29, %24, %cst_27 {dimension_numbers = #tpu.dot_dimension_numbers<[1], [0], [0], [1], [0, 0, 1, 1], [], []>} : vector<64x64xf32>, vector<64x64xf32>, vector<64x64xf32> -> vector<64x64xf32>
    %cst_28 = arith.constant 9.99999997E-7 : f32
    %31 = vector.broadcast %cst_28 : f32 to vector<64x64xf32>
    %32 = arith.addf %30, %31 : vector<64x64xf32>
    %33 = math.rsqrt %32 : vector<64x64xf32>
    %34 = arith.mulf %5, %33 : vector<64x64xf32>
    %35 = vector.broadcast %25 : vector<1x64xf32> to vector<64x64xf32>
    %36 = arith.mulf %34, %35 : vector<64x64xf32>
    %cst_29 = arith.constant dense<0.000000e+00> : vector<64x64xf32>
    %37 = tpu.matmul %36, %26, %cst_29 {dimension_numbers = #tpu.dot_dimension_numbers<[1], [0], [0], [1], [0, 0, 1, 1], [], []>} : vector<64x64xf32>, vector<64x64xf32>, vector<64x64xf32> -> vector<64x64xf32>
    %38 = arith.mulf %36, %27 : vector<64x64xf32>
    %39 = arith.mulf %37, %28 : vector<64x64xf32>
    %40 = arith.addf %38, %39 : vector<64x64xf32>
    %c0_30 = arith.constant 0 : index
    %c0_31 = arith.constant 0 : index
    %c0_32 = arith.constant 0 : index
    %41 = vector.load %arg14[%c0_30, %c0_31, %c0_32] : memref<1x64x128xf32, #tpu.memory_space<vmem>>, vector<1x64x128xf32>
    %42 = vector.shape_cast %41 : vector<1x64x128xf32> to vector<64x128xf32>
    %43 = vector.shape_cast %23 : vector<64x128xf32> to vector<1x64x128xf32>
    tpu.vector_store %arg14[%c0_30, %c0_31, %c0_32], %43 {strides = array<i32>} : memref<1x64x128xf32, #tpu.memory_space<vmem>>, vector<1x64x128xf32>,
    %c0_33 = arith.constant 0 : index
    %c0_34 = arith.constant 0 : index
    %c0_35 = arith.constant 0 : index
    %44 = vector.load %arg15[%c0_33, %c0_34, %c0_35] : memref<1x64x64xf32, #tpu.memory_space<vmem>>, vector<1x64x64xf32>
    %45 = vector.shape_cast %44 : vector<1x64x64xf32> to vector<64x64xf32>
    %46 = vector.shape_cast %40 : vector<64x64xf32> to vector<1x64x64xf32>
    tpu.vector_store %arg15[%c0_33, %c0_34, %c0_35], %46 {strides = array<i32>} : memref<1x64x64xf32, #tpu.memory_space<vmem>>, vector<1x64x64xf32>,
    %c0_36 = arith.constant 0 : index
    %c0_37 = arith.constant 0 : index
    %c0_38 = arith.constant 0 : index
    %47 = vector.load %arg16[%c0_36, %c0_37, %c0_38] : memref<1x64x64xf32, #tpu.memory_space<vmem>>, vector<1x64x64xf32>
    %48 = vector.shape_cast %47 : vector<1x64x64xf32> to vector<64x64xf32>
    %49 = vector.shape_cast %6 : vector<64x64xf32> to vector<1x64x64xf32>
    tpu.vector_store %arg16[%c0_36, %c0_37, %c0_38], %49 {strides = array<i32>} : memref<1x64x64xf32, #tpu.memory_space<vmem>>, vector<1x64x64xf32>,
    return
  }
  func.func @transform_0(%arg0: i32, %arg1: i32) -> (i32, i32, i32) {
    %c0_i32 = arith.constant 0 : i32
    %c0_i32_0 = arith.constant 0 : i32
    return %arg0, %arg1, %c0_i32 : i32, i32, i32
  }
  func.func @transform_1(%arg0: i32, %arg1: i32) -> (i32, i32) {
    %c0_i32 = arith.constant 0 : i32
    %c0_i32_0 = arith.constant 0 : i32
    %c0_i32_1 = arith.constant 0 : i32
    return %c0_i32, %c0_i32_0 : i32, i32
  }
  func.func @transform_2(%arg0: i32, %arg1: i32) -> (i32, i32) {
    %c0_i32 = arith.constant 0 : i32
    %c0_i32_0 = arith.constant 0 : i32
    return %arg1, %c0_i32 : i32, i32
  }
  func.func @transform_3(%arg0: i32, %arg1: i32) -> (i32, i32) {
    %c0_i32 = arith.constant 0 : i32
    %c0_i32_0 = arith.constant 0 : i32
    return %arg1, %c0_i32 : i32, i32
  }
  func.func @transform_4(%arg0: i32, %arg1: i32) -> (i32, i32) {
    %c0_i32 = arith.constant 0 : i32
    %c0_i32_0 = arith.constant 0 : i32
    return %arg1, %c0_i32 : i32, i32
  }
  func.func @transform_5(%arg0: i32, %arg1: i32) -> (i32, i32) {
    %c0_i32 = arith.constant 0 : i32
    %c0_i32_0 = arith.constant 0 : i32
    return %arg1, %c0_i32 : i32, i32
  }
  func.func @transform_6(%arg0: i32, %arg1: i32) -> (i32, i32) {
    %c0_i32 = arith.constant 0 : i32
    %c0_i32_0 = arith.constant 0 : i32
    %c0_i32_1 = arith.constant 0 : i32
    return %c0_i32, %c0_i32_0 : i32, i32
  }
  func.func @transform_7(%arg0: i32, %arg1: i32) -> (i32, i32) {
    %c0_i32 = arith.constant 0 : i32
    %c0_i32_0 = arith.constant 0 : i32
    %c0_i32_1 = arith.constant 0 : i32
    return %c0_i32, %c0_i32_0 : i32, i32
  }
  func.func @transform_8(%arg0: i32, %arg1: i32) -> (i32, i32) {
    %c0_i32 = arith.constant 0 : i32
    %c0_i32_0 = arith.constant 0 : i32
    %c0_i32_1 = arith.constant 0 : i32
    return %c0_i32, %c0_i32_0 : i32, i32
  }
  func.func @transform_9(%arg0: i32, %arg1: i32) -> (i32, i32) {
    %c0_i32 = arith.constant 0 : i32
    %c0_i32_0 = arith.constant 0 : i32
    %c0_i32_1 = arith.constant 0 : i32
    return %c0_i32, %c0_i32_0 : i32, i32
  }
  func.func @transform_10(%arg0: i32, %arg1: i32) -> (i32, i32) {
    %c0_i32 = arith.constant 0 : i32
    %c0_i32_0 = arith.constant 0 : i32
    %c0_i32_1 = arith.constant 0 : i32
    return %c0_i32, %c0_i32_0 : i32, i32
  }
  func.func @transform_11(%arg0: i32, %arg1: i32) -> (i32, i32) {
    %c0_i32 = arith.constant 0 : i32
    %c0_i32_0 = arith.constant 0 : i32
    %c0_i32_1 = arith.constant 0 : i32
    return %c0_i32, %c0_i32_0 : i32, i32
  }
  func.func @transform_12(%arg0: i32, %arg1: i32) -> (i32, i32, i32) {
    %c0_i32 = arith.constant 0 : i32
    %c0_i32_0 = arith.constant 0 : i32
    return %arg0, %arg1, %c0_i32 : i32, i32, i32
  }
  func.func @transform_13(%arg0: i32, %arg1: i32) -> (i32, i32, i32) {
    %c0_i32 = arith.constant 0 : i32
    %c0_i32_0 = arith.constant 0 : i32
    return %arg0, %arg1, %c0_i32 : i32, i32, i32
  }
  func.func @transform_14(%arg0: i32, %arg1: i32) -> (i32, i32, i32) {
    %c0_i32 = arith.constant 0 : i32
    %c0_i32_0 = arith.constant 0 : i32
    return %arg0, %arg1, %c0_i32 : i32, i32, i32
  }
}

</mosaic_0001>

<llo_original>
// kernel: tpu_custom_call.1
$region0: #{tpu_custom_call.1}
  #allocation0 [shape = 'u32[]', space=smem, size = 0x4, offset = 0x4, fixed_abs, tag = 'smem constant byte address 0x4 - core index']
  #allocation1 [shape = 'u32[144,128]{1,0:T(1,128)}', space=vmem, size = 0x12000, scoped, tag = 'internal scratch']
  %s0 = inlined_call_operand.vmem [shape: f32[2,256,128], index: 0, kind: input, shape index: {}]
  %s1 = inlined_call_operand.vmem [shape: f32[128,256], index: 1, kind: input, shape index: {}]
  %s2 = inlined_call_operand.hbm [shape: f32[256,128], index: 2, kind: input, shape index: {}]
  %s3 = inlined_call_operand.hbm [shape: f32[256,128], index: 3, kind: input, shape index: {}]
  %s4 = inlined_call_operand.vmem [shape: f32[256,64], index: 4, kind: input, shape index: {}]
  %s5 = inlined_call_operand.vmem [shape: f32[256,64], index: 5, kind: input, shape index: {}]
  %s6 = inlined_call_operand.hbm [shape: f32[128,128], index: 6, kind: input, shape index: {}]
  %s7 = inlined_call_operand.hbm [shape: f32[64,64], index: 7, kind: input, shape index: {}]
  %s8 = inlined_call_operand.hbm [shape: f32[128,128], index: 8, kind: input, shape index: {}]
  %s9 = inlined_call_operand.hbm [shape: f32[64,64], index: 9, kind: input, shape index: {}]
  %s10 = inlined_call_operand.vmem [shape: f32[1,128], index: 10, kind: input, shape index: {}]
  %s11 = inlined_call_operand.vmem [shape: f32[1,64], index: 11, kind: input, shape index: {}]
  %s12 = inlined_call_operand.hbm [shape: f32[2,256,128], index: 12, kind: output, shape index: {0}]
  %s13 = inlined_call_operand.vmem [shape: f32[2,256,64], index: 13, kind: output, shape index: {1}]
  %s14 = inlined_call_operand.vmem [shape: f32[2,256,64], index: 14, kind: output, shape index: {2}]
  %15 = xla_tuple %s12, %s13, %s14
  %s16 = sld [smem:[#allocation0]]
  $region121: #{tpu_custom_call.1} parent=0
    _
  %s18 = ssub.s32 1, %s16
  %s19 = scalar_select 0, %s18, %s16
  $region1: #{tpu_custom_call.1} parent=0
    #allocation2 [shape = 'u8[65536]{0}', space=vmem, size = 0x10000, scoped, tag = 'input window, operand 2']
    #allocation3 [shape = 's32[2]{0}', space=sflag, size = 0x8, scoped, tag = 'scoped memory for tpu_custom_call.1']
    #allocation4 [shape = 's32[2]{0}', space=sflag, size = 0x8, scoped, tag = 'scoped memory for tpu_custom_call.1']
    #allocation5 [shape = 'u8[65536]{0}', space=vmem, size = 0x10000, scoped, tag = 'input window, operand 3']
    #allocation6 [shape = 's32[2]{0}', space=sflag, size = 0x8, scoped, tag = 'scoped memory for tpu_custom_call.1']
    #allocation7 [shape = 'u8[65536]{0}', space=vmem, size = 0x10000, scoped, tag = 'input window, operand 6, single buffered']
    #allocation8 [shape = 'u8[32768]{0}', space=vmem, size = 0x8000, scoped, tag = 'input window, operand 7, single buffered']
    #allocation9 [shape = 's32[1]{0}', space=sflag, size = 0x4, scoped, tag = 'scoped memory for tpu_custom_call.1']
    #allocation10 [shape = 'u8[65536]{0}', space=vmem, size = 0x10000, scoped, tag = 'input window, operand 8, single buffered']
    #allocation11 [shape = 'u8[32768]{0}', space=vmem, size = 0x8000, scoped, tag = 'input window, operand 9, single buffered']
    #allocation12 [shape = 's32[1]{0}', space=sflag, size = 0x4, scoped, tag = 'scoped memory for tpu_custom_call.1']
    #allocation13 [shape = 'u8[65536]{0}', space=vmem, size = 0x10000, scoped, tag = 'output window, operand 0']
    %20 = vsyncpa [#allocation3], 0
    %s21 = scalar_lea.sflag [#allocation3], 1
    %22 = vsyncpa %s21, 0
    %23 = vsyncpa [#allocation6], 0
    %s24 = scalar_lea.sflag [#allocation6], 1
    %25 = vsyncpa %s24, 0
    %26 = vsyncpa [#allocation9], 0
    %27 = vsyncpa [#allocation12], 0
    %28 = vsyncpa [#allocation4], 0
    %s29 = scalar_lea.sflag [#allocation4], 1
    %30 = vsyncpa %s29, 0
    loop: start=0, step=1, limit=10
    $region2: #{tpu_custom_call.1} parent=1 // loop_pre_header
      _
    $region3: #{tpu_custom_call.1} parent=1 // loop_header
      %s32 = sphi 0, %s36
      %p33 = scmp.ge.s32.totalorder %s32, 10
      %s39 = sphi 0, %s51
      %s40 = sphi 0, %s47
      %s41 = sphi 0, %s39
      %s42 = sphi 0, %s40
      %s43 = sphi 0, %s41
      %s44 = sphi 0, %s42
      %s56 = sphi 0, %s58
      %s59 = sphi 0, %s56
      %s60 = sphi 0, %s59
      %s76 = sphi 0, %s60
      %s80 = sphi 0, %s80
      %s82 = sphi 0, %s80
      %s83 = sphi 0, %s82
      %s97 = sphi 0, %s83
      %s103 = sphi 0, %s105
      %s106 = sphi 0, %s103
      %s107 = sphi 0, %s106
      %s123 = sphi 0, %s107
      %s129 = sphi 0, %s131
      %s132 = sphi 0, %s129
      %s133 = sphi 0, %s132
      %s149 = sphi 0, %s133
      %s155 = sphi 0, %s157
      %s158 = sphi 0, %s155
      %s159 = sphi 0, %s158
      %s175 = sphi 0, %s159
      %s181 = sphi 0, %s183
      %s184 = sphi 0, %s181
      %s185 = sphi 0, %s184
      %s201 = sphi 0, %s185
      %s205 = sphi 0, %s205
      %s207 = sphi 0, %s205
      %s208 = sphi 0, %s207
      %s222 = sphi 0, %s208
      %s226 = sphi 0, %s226
      %s228 = sphi 0, %s226
      %s229 = sphi 0, %s228
      %s243 = sphi 0, %s229
      %s247 = sphi 0, %s247
      %s249 = sphi 0, %s247
      %s250 = sphi 0, %s249
      %s264 = sphi 0, %s250
      %s268 = sphi 0, %s268
      %s270 = sphi 0, %s268
      %s271 = sphi 0, %s270
      %s285 = sphi 0, %s271
      %s289 = sphi 0, %s289
      %s291 = sphi 0, %s289
      %s292 = sphi 0, %s291
      %s306 = sphi 0, %s292
      %s310 = sphi 0, %s310
      %s312 = sphi 0, %s310
      %s313 = sphi 0, %s312
      %s327 = sphi 0, %s313
      %s335 = sphi 0, %s337
      %s338 = sphi 0, %s335
      %s339 = sphi 0, %s338
      %s355 = sphi 0, %s339
      %s363 = sphi 0, %s365
      %s366 = sphi 0, %s363
      %s367 = sphi 0, %s366
      %s383 = sphi 0, %s367
      %s391 = sphi 0, %s393
      %s394 = sphi 0, %s391
      %s395 = sphi 0, %s394
      %s411 = sphi 0, %s395
    $region4: #{tpu_custom_call.1} parent=1 // loop_header_branch
      %35 = sbr.rel (%p33) target = $region8
    $region5: #{tpu_custom_call.1} parent=1 // loop_body
      %s37 = ssub.s32 %s32, 1
      %s38 = ssub.s32 %s32, 2
      %s45 = sadd.s32 1, %s40
      %p46 = scmp.ge.s32.totalorder %s45, 4
      %s47 = scalar_select %p46, 0, %s45
      %s48 = sadd.s32 1, %s39
      %s49 = scalar_select %p46, %s48, %s39
      %p50 = scmp.ge.s32.totalorder %s49, 2
      %s51 = scalar_select %p50, 0, %s49
      %s52 = ssub.s32 %s39, %s51
      %s53 = ssub.s32 %s40, %s47
      %s54 = sor.u32 %s52, %s53
      %p55 = scmp.eq.s32.totalorder %s54, 0
      %s57 = sadd.s32 %s56, 1
      %s58 = scalar_select %p55, %s56, %s57
      %p61 = pneg %p55
      %p62 = scmp.eq.s32.totalorder %s32, 7
      %p63 = por %p61, %p62
      %p64 = scmp.ne.s32.totalorder %s56, %s59
      %p65 = scmp.eq.s32.totalorder %s32, 0
      %p66 = por %p64, %p65
      %p67 = scmp.ne.s32.totalorder %s56, %s59
      %p68 = scmp.eq.s32.totalorder %s37, 7
      %p69 = por %p67, %p68
      %p70 = scmp.ne.s32.totalorder %s59, %s60
      %p71 = scmp.eq.s32.totalorder %s37, 0
      %p72 = por %p70, %p71
      %p73 = scmp.ne.s32.totalorder %s59, %s60
      %p74 = scmp.eq.s32.totalorder %s38, 7
      %p75 = por %p73, %p74
      %p77 = scmp.ne.s32.totalorder %s60, %s76
      %p78 = scmp.eq.s32.totalorder %s38, 0
      %p79 = por %p77, %p78
      %s81 = sadd.s32 %s80, 1
      %p84 = scmp.eq.s32.totalorder %s32, 7
      %p85 = scmp.ne.s32.totalorder %s80, %s82
      %p86 = scmp.eq.s32.totalorder %s32, 0
      %p87 = por %p85, %p86
      %p88 = scmp.ne.s32.totalorder %s80, %s82
      %p89 = scmp.eq.s32.totalorder %s37, 7
      %p90 = por %p88, %p89
      %p91 = scmp.ne.s32.totalorder %s82, %s83
      %p92 = scmp.eq.s32.totalorder %s37, 0
      %p93 = por %p91, %p92
      %p94 = scmp.ne.s32.totalorder %s82, %s83
      %p95 = scmp.eq.s32.totalorder %s38, 7
      %p96 = por %p94, %p95
      %p98 = scmp.ne.s32.totalorder %s83, %s97
      %p99 = scmp.eq.s32.totalorder %s38, 0
      %p100 = por %p98, %p99
      %s101 = ssub.s32 %s40, %s47
      %p102 = scmp.eq.s32.totalorder %s101, 0
      %s104 = sadd.s32 %s103, 1
      %s105 = scalar_select %p102, %s103, %s104
      %p108 = pneg %p102
      %p109 = scmp.eq.s32.totalorder %s32, 7
      %p110 = por %p108, %p109
      %p111 = scmp.ne.s32.totalorder %s103, %s106
      %p112 = scmp.eq.s32.totalorder %s32, 0
      %p113 = por %p111, %p112
      %p114 = scmp.ne.s32.totalorder %s103, %s106
      %p115 = scmp.eq.s32.totalorder %s37, 7
      %p116 = por %p114, %p115
      %p117 = scmp.ne.s32.totalorder %s106, %s107
      %p118 = scmp.eq.s32.totalorder %s37, 0
      %p119 = por %p117, %p118
      %p120 = scmp.ne.s32.totalorder %s106, %s107
      %p121 = scmp.eq.s32.totalorder %s38, 7
      %p122 = por %p120, %p121
      %p124 = scmp.ne.s32.totalorder %s107, %s123
      %p125 = scmp.eq.s32.totalorder %s38, 0
      %p126 = por %p124, %p125
      %s127 = ssub.s32 %s40, %s47
      %p128 = scmp.eq.s32.totalorder %s127, 0
      %s130 = sadd.s32 %s129, 1
      %s131 = scalar_select %p128, %s129, %s130
      %p134 = pneg %p128
      %p135 = scmp.eq.s32.totalorder %s32, 7
      %p136 = por %p134, %p135
      %p137 = scmp.ne.s32.totalorder %s129, %s132
      %p138 = scmp.eq.s32.totalorder %s32, 0
      %p139 = por %p137, %p138
      %p140 = scmp.ne.s32.totalorder %s129, %s132
      %p141 = scmp.eq.s32.totalorder %s37, 7
      %p142 = por %p140, %p141
      %p143 = scmp.ne.s32.totalorder %s132, %s133
      %p144 = scmp.eq.s32.totalorder %s37, 0
      %p145 = por %p143, %p144
      %p146 = scmp.ne.s32.totalorder %s132, %s133
      %p147 = scmp.eq.s32.totalorder %s38, 7
      %p148 = por %p146, %p147
      %p150 = scmp.ne.s32.totalorder %s133, %s149
      %p151 = scmp.eq.s32.totalorder %s38, 0
      %p152 = por %p150, %p151
      %s153 = ssub.s32 %s40, %s47
      %p154 = scmp.eq.s32.totalorder %s153, 0
      %s156 = sadd.s32 %s155, 1
      %s157 = scalar_select %p154, %s155, %s156
      %p160 = pneg %p154
      %p161 = scmp.eq.s32.totalorder %s32, 7
      %p162 = por %p160, %p161
      %p163 = scmp.ne.s32.totalorder %s155, %s158
      %p164 = scmp.eq.s32.totalorder %s32, 0
      %p165 = por %p163, %p164
      %p166 = scmp.ne.s32.totalorder %s155, %s158
      %p167 = scmp.eq.s32.totalorder %s37, 7
      %p168 = por %p166, %p167
      %p169 = scmp.ne.s32.totalorder %s158, %s159
      %p170 = scmp.eq.s32.totalorder %s37, 0
      %p171 = por %p169, %p170
      %p172 = scmp.ne.s32.totalorder %s158, %s159
      %p173 = scmp.eq.s32.totalorder %s38, 7
      %p174 = por %p172, %p173
      %p176 = scmp.ne.s32.totalorder %s159, %s175
      %p177 = scmp.eq.s32.totalorder %s38, 0
      %p178 = por %p176, %p177
      %s179 = ssub.s32 %s40, %s47
      %p180 = scmp.eq.s32.totalorder %s179, 0
      %s182 = sadd.s32 %s181, 1
      %s183 = scalar_select %p180, %s181, %s182
      %p186 = pneg %p180
      %p187 = scmp.eq.s32.totalorder %s32, 7
      %p188 = por %p186, %p187
      %p189 = scmp.ne.s32.totalorder %s181, %s184
      %p190 = scmp.eq.s32.totalorder %s32, 0
      %p191 = por %p189, %p190
      %p192 = scmp.ne.s32.totalorder %s181, %s184
      %p193 = scmp.eq.s32.totalorder %s37, 7
      %p194 = por %p192, %p193
      %p195 = scmp.ne.s32.totalorder %s184, %s185
      %p196 = scmp.eq.s32.totalorder %s37, 0
      %p197 = por %p195, %p196
      %p198 = scmp.ne.s32.totalorder %s184, %s185
      %p199 = scmp.eq.s32.totalorder %s38, 7
      %p200 = por %p198, %p199
      %p202 = scmp.ne.s32.totalorder %s185, %s201
      %p203 = scmp.eq.s32.totalorder %s38, 0
      %p204 = por %p202, %p203
      %s206 = sadd.s32 %s205, 1
      %p209 = scmp.eq.s32.totalorder %s32, 7
      %p210 = scmp.ne.s32.totalorder %s205, %s207
      %p211 = scmp.eq.s32.totalorder %s32, 0
      %p212 = por %p210, %p211
      %p213 = scmp.ne.s32.totalorder %s205, %s207
      %p214 = scmp.eq.s32.totalorder %s37, 7
      %p215 = por %p213, %p214
      %p216 = scmp.ne.s32.totalorder %s207, %s208
      %p217 = scmp.eq.s32.totalorder %s37, 0
      %p218 = por %p216, %p217
      %p219 = scmp.ne.s32.totalorder %s207, %s208
      %p220 = scmp.eq.s32.totalorder %s38, 7
      %p221 = por %p219, %p220
      %p223 = scmp.ne.s32.totalorder %s208, %s222
      %p224 = scmp.eq.s32.totalorder %s38, 0
      %p225 = por %p223, %p224
      %s227 = sadd.s32 %s226, 1
      %p230 = scmp.eq.s32.totalorder %s32, 7
      %p231 = scmp.ne.s32.totalorder %s226, %s228
      %p232 = scmp.eq.s32.totalorder %s32, 0
      %p233 = por %p231, %p232
      %p234 = scmp.ne.s32.totalorder %s226, %s228
      %p235 = scmp.eq.s32.totalorder %s37, 7
      %p236 = por %p234, %p235
      %p237 = scmp.ne.s32.totalorder %s228, %s229
      %p238 = scmp.eq.s32.totalorder %s37, 0
      %p239 = por %p237, %p238
      %p240 = scmp.ne.s32.totalorder %s228, %s229
      %p241 = scmp.eq.s32.totalorder %s38, 7
      %p242 = por %p240, %p241
      %p244 = scmp.ne.s32.totalorder %s229, %s243
      %p245 = scmp.eq.s32.totalorder %s38, 0
      %p246 = por %p244, %p245
      %s248 = sadd.s32 %s247, 1
      %p251 = scmp.eq.s32.totalorder %s32, 7
      %p252 = scmp.ne.s32.totalorder %s247, %s249
      %p253 = scmp.eq.s32.totalorder %s32, 0
      %p254 = por %p252, %p253
      %p255 = scmp.ne.s32.totalorder %s247, %s249
      %p256 = scmp.eq.s32.totalorder %s37, 7
      %p257 = por %p255, %p256
      %p258 = scmp.ne.s32.totalorder %s249, %s250
      %p259 = scmp.eq.s32.totalorder %s37, 0
      %p260 = por %p258, %p259
      %p261 = scmp.ne.s32.totalorder %s249, %s250
      %p262 = scmp.eq.s32.totalorder %s38, 7
      %p263 = por %p261, %p262
      %p265 = scmp.ne.s32.totalorder %s250, %s264
      %p266 = scmp.eq.s32.totalorder %s38, 0
      %p267 = por %p265, %p266
      %s269 = sadd.s32 %s268, 1
      %p272 = scmp.eq.s32.totalorder %s32, 7
      %p273 = scmp.ne.s32.totalorder %s268, %s270
      %p274 = scmp.eq.s32.totalorder %s32, 0
      %p275 = por %p273, %p274
      %p276 = scmp.ne.s32.totalorder %s268, %s270
      %p277 = scmp.eq.s32.totalorder %s37, 7
      %p278 = por %p276, %p277
      %p279 = scmp.ne.s32.totalorder %s270, %s271
      %p280 = scmp.eq.s32.totalorder %s37, 0
      %p281 = por %p279, %p280
      %p282 = scmp.ne.s32.totalorder %s270, %s271
      %p283 = scmp.eq.s32.totalorder %s38, 7
      %p284 = por %p282, %p283
      %p286 = scmp.ne.s32.totalorder %s271, %s285
      %p287 = scmp.eq.s32.totalorder %s38, 0
      %p288 = por %p286, %p287
      %s290 = sadd.s32 %s289, 1
      %p293 = scmp.eq.s32.totalorder %s32, 7
      %p294 = scmp.ne.s32.totalorder %s289, %s291
      %p295 = scmp.eq.s32.totalorder %s32, 0
      %p296 = por %p294, %p295
      %p297 = scmp.ne.s32.totalorder %s289, %s291
      %p298 = scmp.eq.s32.totalorder %s37, 7
      %p299 = por %p297, %p298
      %p300 = scmp.ne.s32.totalorder %s291, %s292
      %p301 = scmp.eq.s32.totalorder %s37, 0
      %p302 = por %p300, %p301
      %p303 = scmp.ne.s32.totalorder %s291, %s292
      %p304 = scmp.eq.s32.totalorder %s38, 7
      %p305 = por %p303, %p304
      %p307 = scmp.ne.s32.totalorder %s292, %s306
      %p308 = scmp.eq.s32.totalorder %s38, 0
      %p309 = por %p307, %p308
      %s311 = sadd.s32 %s310, 1
      %p314 = scmp.eq.s32.totalorder %s32, 7
      %p315 = scmp.ne.s32.totalorder %s310, %s312
      %p316 = scmp.eq.s32.totalorder %s32, 0
      %p317 = por %p315, %p316
      %p318 = scmp.ne.s32.totalorder %s310, %s312
      %p319 = scmp.eq.s32.totalorder %s37, 7
      %p320 = por %p318, %p319
      %p321 = scmp.ne.s32.totalorder %s312, %s313
      %p322 = scmp.eq.s32.totalorder %s37, 0
      %p323 = por %p321, %p322
      %p324 = scmp.ne.s32.totalorder %s312, %s313
      %p325 = scmp.eq.s32.totalorder %s38, 7
      %p326 = por %p324, %p325
      %p328 = scmp.ne.s32.totalorder %s313, %s327
      %p329 = scmp.eq.s32.totalorder %s38, 0
      %p330 = por %p328, %p329
      %s331 = ssub.s32 %s39, %s51
      %s332 = ssub.s32 %s40, %s47
      %s333 = sor.u32 %s331, %s332
      %p334 = scmp.eq.s32.totalorder %s333, 0
      %s336 = sadd.s32 %s335, 1
      %s337 = scalar_select %p334, %s335, %s336
      %p340 = pneg %p334
      %p341 = scmp.eq.s32.totalorder %s32, 7
      %p342 = por %p340, %p341
      %p343 = scmp.ne.s32.totalorder %s335, %s338
      %p344 = scmp.eq.s32.totalorder %s32, 0
      %p345 = por %p343, %p344
      %p346 = scmp.ne.s32.totalorder %s335, %s338
      %p347 = scmp.eq.s32.totalorder %s37, 7
      %p348 = por %p346, %p347
      %p349 = scmp.ne.s32.totalorder %s338, %s339
      %p350 = scmp.eq.s32.totalorder %s37, 0
      %p351 = por %p349, %p350
      %p352 = scmp.ne.s32.totalorder %s338, %s339
      %p353 = scmp.eq.s32.totalorder %s38, 7
      %p354 = por %p352, %p353
      %p356 = scmp.ne.s32.totalorder %s339, %s355
      %p357 = scmp.eq.s32.totalorder %s38, 0
      %p358 = por %p356, %p357
      %s359 = ssub.s32 %s39, %s51
      %s360 = ssub.s32 %s40, %s47
      %s361 = sor.u32 %s359, %s360
      %p362 = scmp.eq.s32.totalorder %s361, 0
      %s364 = sadd.s32 %s363, 1
      %s365 = scalar_select %p362, %s363, %s364
      %p368 = pneg %p362
      %p369 = scmp.eq.s32.totalorder %s32, 7
      %p370 = por %p368, %p369
      %p371 = scmp.ne.s32.totalorder %s363, %s366
      %p372 = scmp.eq.s32.totalorder %s32, 0
      %p373 = por %p371, %p372
      %p374 = scmp.ne.s32.totalorder %s363, %s366
      %p375 = scmp.eq.s32.totalorder %s37, 7
      %p376 = por %p374, %p375
      %p377 = scmp.ne.s32.totalorder %s366, %s367
      %p378 = scmp.eq.s32.totalorder %s37, 0
      %p379 = por %p377, %p378
      %p380 = scmp.ne.s32.totalorder %s366, %s367
      %p381 = scmp.eq.s32.totalorder %s38, 7
      %p382 = por %p380, %p381
      %p384 = scmp.ne.s32.totalorder %s367, %s383
      %p385 = scmp.eq.s32.totalorder %s38, 0
      %p386 = por %p384, %p385
      %s387 = ssub.s32 %s39, %s51
      %s388 = ssub.s32 %s40, %s47
      %s389 = sor.u32 %s387, %s388
      %p390 = scmp.eq.s32.totalorder %s389, 0
      %s392 = sadd.s32 %s391, 1
      %s393 = scalar_select %p390, %s391, %s392
      %p396 = pneg %p390
      %p397 = scmp.eq.s32.totalorder %s32, 7
      %p398 = por %p396, %p397
      %p399 = scmp.ne.s32.totalorder %s391, %s394
      %p400 = scmp.eq.s32.totalorder %s32, 0
      %p401 = por %p399, %p400
      %p402 = scmp.ne.s32.totalorder %s391, %s394
      %p403 = scmp.eq.s32.totalorder %s37, 7
      %p404 = por %p402, %p403
      %p405 = scmp.ne.s32.totalorder %s394, %s395
      %p406 = scmp.eq.s32.totalorder %s37, 0
      %p407 = por %p405, %p406
      %p408 = scmp.ne.s32.totalorder %s394, %s395
      %p409 = scmp.eq.s32.totalorder %s38, 7
      %p410 = por %p408, %p409
      %p412 = scmp.ne.s32.totalorder %s395, %s411
      %p413 = scmp.eq.s32.totalorder %s38, 0
      %p414 = por %p412, %p413
      %p415 = scmp.le.s32.totalorder 1, %s32
      %p416 = scmp.lt.s32.totalorder %s32, 9
      %p417 = pnand %p415, %p416
      %p418 = pneg %p417
      // Predicated region
      $region9: #{tpu_custom_call.1} parent=5 // pred_check
        _
      $region10: #{tpu_custom_call.1} parent=5 // pred_check_branch
        %420 = sbr.rel (%p417) target = $region12
      $region11: #{tpu_custom_call.1} parent=5 // pred_region
        %s421 = ssub.s32 %s32, 1
        // Predicated region
        $region13: #{tpu_custom_call.1} parent=11 // pred_check
          %p422 = pneg %p93
        $region14: #{tpu_custom_call.1} parent=11 // pred_check_branch
          %424 = sbr.rel (%p422) target = $region16
        $region15: #{tpu_custom_call.1} parent=11 // pred_region
          _
        $region16: #{tpu_custom_call.1} parent=11 // pred_fallthru
          _
        // Predicated region
        $region17: #{tpu_custom_call.1} parent=11 // pred_check
          %p425 = pneg %p218
        $region18: #{tpu_custom_call.1} parent=11 // pred_check_branch
          %427 = sbr.rel (%p425) target = $region20
        $region19: #{tpu_custom_call.1} parent=11 // pred_region
          %s429 = ssub.s32 2048, 2048
          %430 = vsyncadd [#allocation6], %s429
          %s431 = sshll.u32 [#allocation7], 4
          %s432 = int_to_ptr.vmem [resolvable:$true] %s431
          %437 = dma.hbm_to_vmem [thread:$0]  %s6, 2048, %s432, [#allocation6], 128, 128, 8
        $region20: #{tpu_custom_call.1} parent=11 // pred_fallthru
          _
        // Predicated region
        $region21: #{tpu_custom_call.1} parent=11 // pred_check
          %p438 = pneg %p239
        $region22: #{tpu_custom_call.1} parent=11 // pred_check_branch
          %440 = sbr.rel (%p438) target = $region24
        $region23: #{tpu_custom_call.1} parent=11 // pred_region
          %s442 = ssub.s32 1024, 1024
          %443 = vsyncadd [#allocation9], %s442
          %s444 = sshll.u32 [#allocation8], 4
          %s445 = int_to_ptr.vmem [resolvable:$true] %s444
          %450 = dma.hbm_to_vmem [thread:$0]  %s7, 1024, %s445, [#allocation9], 128, 128, 8
        $region24: #{tpu_custom_call.1} parent=11 // pred_fallthru
          _
        // Predicated region
        $region25: #{tpu_custom_call.1} parent=11 // pred_check
          %p451 = pneg %p260
        $region26: #{tpu_custom_call.1} parent=11 // pred_check_branch
          %453 = sbr.rel (%p451) target = $region28
        $region27: #{tpu_custom_call.1} parent=11 // pred_region
          %s455 = ssub.s32 2048, 2048
          %456 = vsyncadd [#allocation9], %s455
          %s457 = sshll.u32 [#allocation10], 4
          %s458 = int_to_ptr.vmem [resolvable:$true] %s457
          %463 = dma.hbm_to_vmem [thread:$0]  %s8, 2048, %s458, [#allocation9], 128, 128, 8
        $region28: #{tpu_custom_call.1} parent=11 // pred_fallthru
          _
        // Predicated region
        $region29: #{tpu_custom_call.1} parent=11 // pred_check
          %p464 = pneg %p281
        $region30: #{tpu_custom_call.1} parent=11 // pred_check_branch
          %466 = sbr.rel (%p464) target = $region32
        $region31: #{tpu_custom_call.1} parent=11 // pred_region
          %s468 = ssub.s32 1024, 1024
          %469 = vsyncadd [#allocation12], %s468
          %s470 = sshll.u32 [#allocation11], 4
          %s471 = int_to_ptr.vmem [resolvable:$true] %s470
          %476 = dma.hbm_to_vmem [thread:$0]  %s9, 1024, %s471, [#allocation12], 128, 128, 8
        $region32: #{tpu_custom_call.1} parent=11 // pred_fallthru
          _
        // Predicated region
        $region33: #{tpu_custom_call.1} parent=11 // pred_check
          %p477 = pneg %p302
        $region34: #{tpu_custom_call.1} parent=11 // pred_check_branch
          %479 = sbr.rel (%p477) target = $region36
        $region35: #{tpu_custom_call.1} parent=11 // pred_region
          _
        $region36: #{tpu_custom_call.1} parent=11 // pred_fallthru
          _
        // Predicated region
        $region37: #{tpu_custom_call.1} parent=11 // pred_check
          %p480 = pneg %p323
        $region38: #{tpu_custom_call.1} parent=11 // pred_check_branch
          %482 = sbr.rel (%p480) target = $region40
        $region39: #{tpu_custom_call.1} parent=11 // pred_region
          _
        $region40: #{tpu_custom_call.1} parent=11 // pred_fallthru
          _
      $region12: #{tpu_custom_call.1} parent=5 // pred_fallthru
        _
      %p483 = scmp.lt.s32.totalorder %s32, 8
      // Predicated region
      $region41: #{tpu_custom_call.1} parent=5 // pred_check
        %p484 = pneg %p483
      $region42: #{tpu_custom_call.1} parent=5 // pred_check_branch
        %486 = sbr.rel (%p484) target = $region44
      $region43: #{tpu_custom_call.1} parent=5 // pred_region
        // Predicated region
        $region45: #{tpu_custom_call.1} parent=43 // pred_check
          %p487 = pneg %p66
        $region46: #{tpu_custom_call.1} parent=43 // pred_check_branch
          %489 = sbr.rel (%p487) target = $region48
        $region47: #{tpu_custom_call.1} parent=43 // pred_region
          %s490 = smul.u32 8, %s40
          %p491 = scmp.lt.s32.totalorder %s39, 1
          %s492 = scalar_select %p491, %s39, 1
          %p493 = scmp.lt.s32.totalorder %s490, 31
          %s494 = scalar_select %p493, %s490, 31
          %s495 = smul.addr %s492, 32
          %s496 = sadd.s32 %s494, %s495
          %s497 = smul.addr %s496, 8
          %s498 = scalar_lea.vmem %s0, %s497
          %s499 = smul.u32 8, %s40
        $region48: #{tpu_custom_call.1} parent=43 // pred_fallthru
          _
        // Predicated region
        $region49: #{tpu_custom_call.1} parent=43 // pred_check
          %p500 = pneg %p113
        $region50: #{tpu_custom_call.1} parent=43 // pred_check_branch
          %502 = sbr.rel (%p500) target = $region52
        $region51: #{tpu_custom_call.1} parent=43 // pred_region
          %s503 = sand.u32 %s103, 1
          %s504 = scalar_lea.sflag [#allocation3], %s503
          %s505 = sand.u32 %s103, 1
          %s506 = smul.addr %s505, 64
          %s507 = scalar_lea.vmem [#allocation2], %s506
          %s508 = smul.u32 8, %s40
          %s510 = ssub.s32 1024, 1024
          %511 = vsyncadd %s504, %s510
          %s512 = smul.addr %s508, 128
          %s513 = scalar_lea.hbm %s2, %s512
          %s514 = sshll.u32 %s507, 4
          %s515 = int_to_ptr.vmem [resolvable:$true] %s514
          %520 = dma.hbm_to_vmem [thread:$0]  %s513, 1024, %s515, %s504, 128, 128, 8
        $region52: #{tpu_custom_call.1} parent=43 // pred_fallthru
          _
        // Predicated region
        $region53: #{tpu_custom_call.1} parent=43 // pred_check
          %p521 = pneg %p139
        $region54: #{tpu_custom_call.1} parent=43 // pred_check_branch
          %523 = sbr.rel (%p521) target = $region56
        $region55: #{tpu_custom_call.1} parent=43 // pred_region
          %s524 = sand.u32 %s32, 1
          %s525 = scalar_lea.sflag [#allocation6], %s524
          %s526 = sand.u32 %s129, 1
          %s527 = smul.addr %s526, 64
          %s528 = scalar_lea.vmem [#allocation5], %s527
          %s529 = smul.u32 8, %s40
          %s531 = ssub.s32 1024, 1024
          %532 = vsyncadd %s525, %s531
          %s533 = smul.addr %s529, 128
          %s534 = scalar_lea.hbm %s3, %s533
          %s535 = sshll.u32 %s528, 4
          %s536 = int_to_ptr.vmem [resolvable:$true] %s535
          %541 = dma.hbm_to_vmem [thread:$0]  %s534, 1024, %s536, %s525, 128, 128, 8
        $region56: #{tpu_custom_call.1} parent=43 // pred_fallthru
          _
        // Predicated region
        $region57: #{tpu_custom_call.1} parent=43 // pred_check
          %p542 = pneg %p165
        $region58: #{tpu_custom_call.1} parent=43 // pred_check_branch
          %544 = sbr.rel (%p542) target = $region60
        $region59: #{tpu_custom_call.1} parent=43 // pred_region
          %s545 = smul.u32 8, %s40
          %p546 = scmp.lt.s32.totalorder %s545, 31
          %s547 = scalar_select %p546, %s545, 31
          %s548 = smul.addr %s547, 8
          %s549 = scalar_lea.vmem %s4, %s548
          %s550 = smul.u32 8, %s40
        $region60: #{tpu_custom_call.1} parent=43 // pred_fallthru
          _
        // Predicated region
        $region61: #{tpu_custom_call.1} parent=43 // pred_check
          %p551 = pneg %p191
        $region62: #{tpu_custom_call.1} parent=43 // pred_check_branch
          %553 = sbr.rel (%p551) target = $region64
        $region63: #{tpu_custom_call.1} parent=43 // pred_region
          %s554 = smul.u32 8, %s40
          %p555 = scmp.lt.s32.totalorder %s554, 31
          %s556 = scalar_select %p555, %s554, 31
          %s557 = smul.addr %s556, 8
          %s558 = scalar_lea.vmem %s5, %s557
          %s559 = smul.u32 8, %s40
        $region64: #{tpu_custom_call.1} parent=43 // pred_fallthru
          _
      $region44: #{tpu_custom_call.1} parent=5 // pred_fallthru
        _
      %p560 = scmp.le.s32.totalorder 1, %s32
      %p561 = scmp.lt.s32.totalorder %s32, 9
      %p562 = pnand %p560, %p561
      %p563 = pneg %p562
      // Predicated region
      $region65: #{tpu_custom_call.1} parent=5 // pred_check
        _
      $region66: #{tpu_custom_call.1} parent=5 // pred_check_branch
        %565 = sbr.rel (%p562) target = $region68
      $region67: #{tpu_custom_call.1} parent=5 // pred_region
        %s566 = ssub.s32 %s32, 1
        %s567 = sand.u32 %s106, 1
        %s568 = scalar_lea.sflag [#allocation3], %s567
        %s569 = sand.u32 %s106, 1
        %s570 = smul.addr %s569, 64
        %s571 = scalar_lea.vmem [#allocation2], %s570
        // Predicated region
        $region69: #{tpu_custom_call.1} parent=67 // pred_check
          %p572 = pneg %p119
        $region70: #{tpu_custom_call.1} parent=67 // pred_check_branch
          %574 = sbr.rel (%p572) target = $region72
        $region71: #{tpu_custom_call.1} parent=67 // pred_region
          %575 = dma.done %s568, 1024
        $region72: #{tpu_custom_call.1} parent=67 // pred_fallthru
          _
        %s576 = sand.u32 %s37, 1
        %s577 = scalar_lea.sflag [#allocation6], %s576
        %s578 = sand.u32 %s132, 1
        %s579 = smul.addr %s578, 64
        %s580 = scalar_lea.vmem [#allocation5], %s579
        // Predicated region
        $region73: #{tpu_custom_call.1} parent=67 // pred_check
          %p581 = pneg %p145
        $region74: #{tpu_custom_call.1} parent=67 // pred_check_branch
          %583 = sbr.rel (%p581) target = $region76
        $region75: #{tpu_custom_call.1} parent=67 // pred_region
          %584 = dma.done %s577, 1024
        $region76: #{tpu_custom_call.1} parent=67 // pred_fallthru
          _
        // Predicated region
        $region77: #{tpu_custom_call.1} parent=67 // pred_check
          %p585 = pneg %p218
        $region78: #{tpu_custom_call.1} parent=67 // pred_check_branch
          %587 = sbr.rel (%p585) target = $region80
        $region79: #{tpu_custom_call.1} parent=67 // pred_region
          %588 = dma.done [#allocation6], 2048
        $region80: #{tpu_custom_call.1} parent=67 // pred_fallthru
          _
        // Predicated region
        $region81: #{tpu_custom_call.1} parent=67 // pred_check
          %p589 = pneg %p239
        $region82: #{tpu_custom_call.1} parent=67 // pred_check_branch
          %591 = sbr.rel (%p589) target = $region84
        $region83: #{tpu_custom_call.1} parent=67 // pred_region
          %592 = dma.done [#allocation9], 1024
        $region84: #{tpu_custom_call.1} parent=67 // pred_fallthru
          _
        // Predicated region
        $region85: #{tpu_custom_call.1} parent=67 // pred_check
          %p593 = pneg %p260
        $region86: #{tpu_custom_call.1} parent=67 // pred_check_branch
          %595 = sbr.rel (%p593) target = $region88
        $region87: #{tpu_custom_call.1} parent=67 // pred_region
          %596 = dma.done [#allocation9], 2048
        $region88: #{tpu_custom_call.1} parent=67 // pred_fallthru
          _
        // Predicated region
        $region89: #{tpu_custom_call.1} parent=67 // pred_check
          %p597 = pneg %p281
        $region90: #{tpu_custom_call.1} parent=67 // pred_check_branch
          %599 = sbr.rel (%p597) target = $region92
        $region91: #{tpu_custom_call.1} parent=67 // pred_region
          %600 = dma.done [#allocation12], 1024
        $region92: #{tpu_custom_call.1} parent=67 // pred_fallthru
          _
        %s601 = smul.u32 8, %s42
        %p602 = scmp.lt.s32.totalorder %s41, 1
        %s603 = scalar_select %p602, %s41, 1
        %p604 = scmp.lt.s32.totalorder %s601, 31
        %s605 = scalar_select %p604, %s601, 31
        %s606 = smul.addr %s603, 32
        %s607 = sadd.s32 %s605, %s606
        %s608 = smul.addr %s607, 8
        %s609 = scalar_lea.vmem %s0, %s608
        %p610 = pneg %p72
        %p611 = pneg %p69
        %p612 = pneg %p93
        %p613 = pneg %p90
        %s614 = sand.u32 %s106, 1
        %s615 = scalar_lea.sflag [#allocation3], %s614
        %s616 = sand.u32 %s106, 1
        %s617 = smul.addr %s616, 64
        %s618 = scalar_lea.vmem [#allocation2], %s617
        %p619 = pneg %p119
        %p620 = pneg %p116
        %s621 = sand.u32 %s37, 1
        %s622 = scalar_lea.sflag [#allocation6], %s621
        %s623 = sand.u32 %s132, 1
        %s624 = smul.addr %s623, 64
        %s625 = scalar_lea.vmem [#allocation5], %s624
        %p626 = pneg %p145
        %p627 = pneg %p142
        %s628 = smul.u32 8, %s42
        %p629 = scmp.lt.s32.totalorder %s628, 31
        %s630 = scalar_select %p629, %s628, 31
        %s631 = smul.addr %s630, 8
        %s632 = scalar_lea.vmem %s4, %s631
        %p633 = pneg %p171
        %p634 = pneg %p168
        %s635 = smul.u32 8, %s42
        %p636 = scmp.lt.s32.totalorder %s635, 31
        %s637 = scalar_select %p636, %s635, 31
        %s638 = smul.addr %s637, 8
        %s639 = scalar_lea.vmem %s5, %s638
        %p640 = pneg %p197
        %p641 = pneg %p194
        %p642 = pneg %p218
        %p643 = pneg %p215
        %p644 = pneg %p239
        %p645 = pneg %p236
        %p646 = pneg %p260
        %p647 = pneg %p257
        %p648 = pneg %p281
        %p649 = pneg %p278
        %p650 = pneg %p302
        %p651 = pneg %p299
        %p652 = pneg %p323
        %p653 = pneg %p320
        %p654 = pneg %p351
        %p655 = pneg %p348
        %s656 = sand.u32 %s338, 1
        %s657 = scalar_lea.sflag [#allocation4], %s656
        %s658 = sand.u32 %s338, 1
        %s659 = smul.addr %s658, 64
        %s660 = scalar_lea.vmem [#allocation13], %s659
        %p661 = pneg %p379
        %p662 = pneg %p376
        %s663 = smul.u32 8, %s42
        %p664 = scmp.lt.s32.totalorder %s41, 1
        %s665 = scalar_select %p664, %s41, 1
        %p666 = scmp.lt.s32.totalorder %s663, 31
        %s667 = scalar_select %p666, %s663, 31
        %s668 = smul.addr %s665, 32
        %s669 = sadd.s32 %s667, %s668
        %s670 = smul.addr %s669, 8
        %s671 = scalar_lea.vmem %s13, %s670
        %p672 = pneg %p407
        %p673 = pneg %p404
        %s674 = smul.u32 8, %s42
        %p675 = scmp.lt.s32.totalorder %s41, 1
        %s676 = scalar_select %p675, %s41, 1
        %p677 = scmp.lt.s32.totalorder %s674, 31
        %s678 = scalar_select %p677, %s674, 31
        %s679 = smul.addr %s676, 32
        %s680 = sadd.s32 %s678, %s679
        %s681 = smul.addr %s680, 8
        %s682 = scalar_lea.vmem %s14, %s681
        %s683 = smul.u32 8, %s42
        %p684 = scmp.lt.s32.totalorder %s41, 1
        %s685 = scalar_select %p684, %s41, 1
        %p686 = scmp.lt.s32.totalorder %s683, 31
        %s687 = scalar_select %p686, %s683, 31
        %s688 = smul.addr %s685, 32
        %s689 = sadd.s32 %s687, %s688
        %s690 = smul.addr %s689, 8
        %s691 = scalar_lea.vmem %s0, %s690
        %s692 = smul.u32 8, %s42
        %s693 = smul.u32 8, %s42
        %s694 = smul.u32 8, %s42
        %s695 = smul.u32 8, %s42
        %p696 = scmp.lt.s32.totalorder %s695, 31
        %s697 = scalar_select %p696, %s695, 31
        %s698 = smul.addr %s697, 8
        %s699 = scalar_lea.vmem %s4, %s698
        %s700 = smul.u32 8, %s42
        %s701 = smul.u32 8, %s42
        %p702 = scmp.lt.s32.totalorder %s701, 31
        %s703 = scalar_select %p702, %s701, 31
        %s704 = smul.addr %s703, 8
        %s705 = scalar_lea.vmem %s5, %s704
        %s706 = smul.u32 8, %s42
        %s707 = smul.u32 8, %s42
        %s708 = smul.u32 8, %s42
        %p709 = scmp.lt.s32.totalorder %s41, 1
        %s710 = scalar_select %p709, %s41, 1
        %p711 = scmp.lt.s32.totalorder %s708, 31
        %s712 = scalar_select %p711, %s708, 31
        %s713 = smul.addr %s710, 32
        %s714 = sadd.s32 %s712, %s713
        %s715 = smul.addr %s714, 8
        %s716 = scalar_lea.vmem %s13, %s715
        %s717 = smul.u32 8, %s42
        %s718 = smul.u32 8, %s42
        %p719 = scmp.lt.s32.totalorder %s41, 1
        %s720 = scalar_select %p719, %s41, 1
        %p721 = scmp.lt.s32.totalorder %s718, 31
        %s722 = scalar_select %p721, %s718, 31
        %s723 = smul.addr %s720, 32
        %s724 = sadd.s32 %s722, %s723
        %s725 = smul.addr %s724, 8
        %s726 = scalar_lea.vmem %s14, %s725
        %s727 = smul.u32 8, %s42
        %v728 = vld [vmem:[%s691] sm:$0xff]
        %v729 = vld [vmem:[%s691 + $0x8] sm:$0xff]
        %v730 = vld [vmem:[%s691 + $0x10] sm:$0xff]
        %v731 = vld [vmem:[%s691 + $0x18] sm:$0xff]
        %v732 = vld [vmem:[%s691 + $0x20] sm:$0xff]
        %v733 = vld [vmem:[%s691 + $0x28] sm:$0xff]
        %v734 = vld [vmem:[%s691 + $0x30] sm:$0xff]
        %v735 = vld [vmem:[%s691 + $0x38] sm:$0xff]
        %v736 = vld [vmem:[%s1] sm:$0xff]
        %v737 = vld [vmem:[%s1 + $0x8] sm:$0xff]
        %v738 = vld [vmem:[%s1 + $0x10] sm:$0xff]
        %v739 = vld [vmem:[%s1 + $0x18] sm:$0xff]
        %v740 = vld [vmem:[%s1 + $0x20] sm:$0xff]
        %v741 = vld [vmem:[%s1 + $0x28] sm:$0xff]
        %v742 = vld [vmem:[%s1 + $0x30] sm:$0xff]
        %v743 = vld [vmem:[%s1 + $0x38] sm:$0xff]
        %v744 = vld [vmem:[%s1 + $0x40] sm:$0xff]
        %v745 = vld [vmem:[%s1 + $0x48] sm:$0xff]
        %v746 = vld [vmem:[%s1 + $0x50] sm:$0xff]
        %v747 = vld [vmem:[%s1 + $0x58] sm:$0xff]
        %v748 = vld [vmem:[%s1 + $0x60] sm:$0xff]
        %v749 = vld [vmem:[%s1 + $0x68] sm:$0xff]
        %v750 = vld [vmem:[%s1 + $0x70] sm:$0xff]
        %v751 = vld [vmem:[%s1 + $0x78] sm:$0xff]
        %v752 = vld [vmem:[%s1 + $0x80] sm:$0xff]
        %v753 = vld [vmem:[%s1 + $0x88] sm:$0xff]
        %v754 = vld [vmem:[%s1 + $0x90] sm:$0xff]
        %v755 = vld [vmem:[%s1 + $0x98] sm:$0xff]
        %v756 = vld [vmem:[%s1 + $0xa0] sm:$0xff]
        %v757 = vld [vmem:[%s1 + $0xa8] sm:$0xff]
        %v758 = vld [vmem:[%s1 + $0xb0] sm:$0xff]
        %v759 = vld [vmem:[%s1 + $0xb8] sm:$0xff]
        %v760 = vld [vmem:[%s1 + $0xc0] sm:$0xff]
        %v761 = vld [vmem:[%s1 + $0xc8] sm:$0xff]
        %v762 = vld [vmem:[%s1 + $0xd0] sm:$0xff]
        %v763 = vld [vmem:[%s1 + $0xd8] sm:$0xff]
        %v764 = vld [vmem:[%s1 + $0xe0] sm:$0xff]
        %v765 = vld [vmem:[%s1 + $0xe8] sm:$0xff]
        %v766 = vld [vmem:[%s1 + $0xf0] sm:$0xff]
        %v767 = vld [vmem:[%s1 + $0xf8] sm:$0xff]
        %768 = vmatprep.subr.mxu0 %v737
        %769 = vmatpush1.msra.mxu0 %v736
        %770 = vmatprep.subr.mxu0 %v739
        %771 = vmatpush1.msra.mxu0 %v738
        %772 = vmatprep.subr.mxu0 %v741
        %773 = vmatpush1.msra.mxu0 %v740
        %774 = vmatprep.subr.mxu0 %v743
        %775 = vmatpush1.msra.mxu0 %v742
        %776 = vmatprep.subr.mxu0 %v745
        %777 = vmatpush1.msra.mxu0 %v744
        %778 = vmatprep.subr.mxu0 %v747
        %779 = vmatpush1.msra.mxu0 %v746
        %780 = vmatprep.subr.mxu0 %v749
        %781 = vmatpush1.msra.mxu0 %v748
        %782 = vmatprep.subr.mxu0 %v751
        %783 = vmatpush1.msra.mxu0 %v750
        %784 = vmatprep.subr.mxu0 %v753
        %785 = vmatpush1.msra.mxu0 %v752
        %786 = vmatprep.subr.mxu0 %v755
        %787 = vmatpush1.msra.mxu0 %v754
        %788 = vmatprep.subr.mxu0 %v757
        %789 = vmatpush1.msra.mxu0 %v756
        %790 = vmatprep.subr.mxu0 %v759
        %791 = vmatpush1.msra.mxu0 %v758
        %792 = vmatprep.subr.mxu0 %v761
        %793 = vmatpush1.msra.mxu0 %v760
        %794 = vmatprep.subr.mxu0 %v763
        %795 = vmatpush1.msra.mxu0 %v762
        %796 = vmatprep.subr.mxu0 %v765
        %797 = vmatpush1.msra.mxu0 %v764
        %798 = vmatprep.subr.mxu0 %v767
        %799 = vmatpush1.msra.mxu0 %v766
        %800 = vmatprep.subr.mxu0 0.0
        %801 = vmatpush1.msra.mxu0 0.0
        %802 = vmatprep.subr.mxu0 0.0
        %803 = vmatpush1.msra.mxu0 0.0
        %804 = vmatprep.subr.mxu0 0.0
        %805 = vmatpush1.msra.mxu0 0.0
        %806 = vmatprep.subr.mxu0 0.0
        %807 = vmatpush1.msra.mxu0 0.0
        %808 = vmatprep.subr.mxu0 0.0
        %809 = vmatpush1.msra.mxu0 0.0
        %810 = vmatprep.subr.mxu0 0.0
        %811 = vmatpush1.msra.mxu0 0.0
        %812 = vmatprep.subr.mxu0 0.0
        %813 = vmatpush1.msra.mxu0 0.0
        %814 = vmatprep.subr.mxu0 0.0
        %815 = vmatpush1.msra.mxu0 0.0
        %816 = vmatprep.subr.mxu0 0.0
        %817 = vmatpush1.msra.mxu0 0.0
        %818 = vmatprep.subr.mxu0 0.0
        %819 = vmatpush1.msra.mxu0 0.0
        %820 = vmatprep.subr.mxu0 0.0
        %821 = vmatpush1.msra.mxu0 0.0
        %822 = vmatprep.subr.mxu0 0.0
        %823 = vmatpush1.msra.mxu0 0.0
        %824 = vmatprep.subr.mxu0 0.0
        %825 = vmatpush1.msra.mxu0 0.0
        %826 = vmatprep.subr.mxu0 0.0
        %827 = vmatpush1.msra.mxu0 0.0
        %828 = vmatprep.subr.mxu0 0.0
        %829 = vmatpush1.msra.mxu0 0.0
        %830 = vmatprep.subr.mxu0 0.0
        %831 = vmatpush1.msra.mxu0 0.0
        %832 = vmatprep.mubr.f32.mxu0 0.0
        %833 = vmatmul.mubr.f32.gmra.mrb[0].mxu0 %v728
        %v834 = vpop.f32.mrb[0].mxu0
        %v835 = vadd.f32 0.0, %v834
        %v836 = vpop.f32.mrb[0].mxu0
        %v837 = vadd.f32 0.0, %v836
        %838 = vmatprep.mubr.f32.mxu0 0.0
        %839 = vmatmul.mubr.f32.gmra.mrb[0].mxu0 %v729
        %v840 = vpop.f32.mrb[0].mxu0
        %v841 = vadd.f32 0.0, %v840
        %v842 = vpop.f32.mrb[0].mxu0
        %v843 = vadd.f32 0.0, %v842
        %844 = vmatprep.mubr.f32.mxu0 0.0
        %845 = vmatmul.mubr.f32.gmra.mrb[0].mxu0 %v730
        %v846 = vpop.f32.mrb[0].mxu0
        %v847 = vadd.f32 0.0, %v846
        %v848 = vpop.f32.mrb[0].mxu0
        %v849 = vadd.f32 0.0, %v848
        %850 = vmatprep.mubr.f32.mxu0 0.0
        %851 = vmatmul.mubr.f32.gmra.mrb[0].mxu0 %v731
        %v852 = vpop.f32.mrb[0].mxu0
        %v853 = vadd.f32 0.0, %v852
        %v854 = vpop.f32.mrb[0].mxu0
        %v855 = vadd.f32 0.0, %v854
        %856 = vmatprep.mubr.f32.mxu0 0.0
        %857 = vmatmul.mubr.f32.gmra.mrb[0].mxu0 %v732
        %v858 = vpop.f32.mrb[0].mxu0
        %v859 = vadd.f32 0.0, %v858
        %v860 = vpop.f32.mrb[0].mxu0
        %v861 = vadd.f32 0.0, %v860
        %862 = vmatprep.mubr.f32.mxu0 0.0
        %863 = vmatmul.mubr.f32.gmra.mrb[0].mxu0 %v733
        %v864 = vpop.f32.mrb[0].mxu0
        %v865 = vadd.f32 0.0, %v864
        %v866 = vpop.f32.mrb[0].mxu0
        %v867 = vadd.f32 0.0, %v866
        %868 = vmatprep.mubr.f32.mxu0 0.0
        %869 = vmatmul.mubr.f32.gmra.mrb[0].mxu0 %v734
        %v870 = vpop.f32.mrb[0].mxu0
        %v871 = vadd.f32 0.0, %v870
        %v872 = vpop.f32.mrb[0].mxu0
        %v873 = vadd.f32 0.0, %v872
        %874 = vmatprep.mubr.f32.mxu0 0.0
        %875 = vmatmul.mubr.f32.gmra.mrb[0].mxu0 %v735
        %v876 = vpop.f32.mrb[0].mxu0
        %v877 = vadd.f32 0.0, %v876
        %v878 = vpop.f32.mrb[0].mxu0
        %v879 = vadd.f32 0.0, %v878
        %880 = vdwg.mxu0
        %v881 = vld [vmem:[#allocation10] sm:$0xff]
        %v882 = vld [vmem:[#allocation10 + $0x8] sm:$0xff]
        %v883 = vld [vmem:[#allocation10 + $0x10] sm:$0xff]
        %v884 = vld [vmem:[#allocation10 + $0x18] sm:$0xff]
        %v885 = vld [vmem:[#allocation10 + $0x20] sm:$0xff]
        %v886 = vld [vmem:[#allocation10 + $0x28] sm:$0xff]
        %v887 = vld [vmem:[#allocation10 + $0x30] sm:$0xff]
        %v888 = vld [vmem:[#allocation10 + $0x38] sm:$0xff]
        %v889 = vld [vmem:[#allocation10 + $0x40] sm:$0xff]
        %v890 = vld [vmem:[#allocation10 + $0x48] sm:$0xff]
        %v891 = vld [vmem:[#allocation10 + $0x50] sm:$0xff]
        %v892 = vld [vmem:[#allocation10 + $0x58] sm:$0xff]
        %v893 = vld [vmem:[#allocation10 + $0x60] sm:$0xff]
        %v894 = vld [vmem:[#allocation10 + $0x68] sm:$0xff]
        %v895 = vld [vmem:[#allocation10 + $0x70] sm:$0xff]
        %v896 = vld [vmem:[#allocation10 + $0x78] sm:$0xff]
        %v897 = vld [vmem:[%s10] sm:$0x1]
        %v898 = vld [vmem:[#allocation7] sm:$0xff]
        %v899 = vld [vmem:[#allocation7 + $0x8] sm:$0xff]
        %v900 = vld [vmem:[#allocation7 + $0x10] sm:$0xff]
        %v901 = vld [vmem:[#allocation7 + $0x18] sm:$0xff]
        %v902 = vld [vmem:[#allocation7 + $0x20] sm:$0xff]
        %v903 = vld [vmem:[#allocation7 + $0x28] sm:$0xff]
        %v904 = vld [vmem:[#allocation7 + $0x30] sm:$0xff]
        %v905 = vld [vmem:[#allocation7 + $0x38] sm:$0xff]
        %v906 = vld [vmem:[#allocation7 + $0x40] sm:$0xff]
        %v907 = vld [vmem:[#allocation7 + $0x48] sm:$0xff]
        %v908 = vld [vmem:[#allocation7 + $0x50] sm:$0xff]
        %v909 = vld [vmem:[#allocation7 + $0x58] sm:$0xff]
        %v910 = vld [vmem:[#allocation7 + $0x60] sm:$0xff]
        %v911 = vld [vmem:[#allocation7 + $0x68] sm:$0xff]
        %v912 = vld [vmem:[#allocation7 + $0x70] sm:$0xff]
        %v913 = vld [vmem:[#allocation7 + $0x78] sm:$0xff]
        %v914 = vld [vmem:[%s571] sm:$0xff]
        %v915 = vld [vmem:[%s571 + $0x8] sm:$0xff]
        %v916 = vld [vmem:[%s571 + $0x10] sm:$0xff]
        %v917 = vld [vmem:[%s571 + $0x18] sm:$0xff]
        %v918 = vld [vmem:[%s571 + $0x20] sm:$0xff]
        %v919 = vld [vmem:[%s571 + $0x28] sm:$0xff]
        %v920 = vld [vmem:[%s571 + $0x30] sm:$0xff]
        %v921 = vld [vmem:[%s571 + $0x38] sm:$0xff]
        %v922 = vld [vmem:[%s580] sm:$0xff]
        %v923 = vld [vmem:[%s580 + $0x8] sm:$0xff]
        %v924 = vld [vmem:[%s580 + $0x10] sm:$0xff]
        %v925 = vld [vmem:[%s580 + $0x18] sm:$0xff]
        %v926 = vld [vmem:[%s580 + $0x20] sm:$0xff]
        %v927 = vld [vmem:[%s580 + $0x28] sm:$0xff]
        %v928 = vld [vmem:[%s580 + $0x30] sm:$0xff]
        %v929 = vld [vmem:[%s580 + $0x38] sm:$0xff]
        %v930 = vmul.f32 %v835, %v835
        %v931 = vmul.f32 %v841, %v841
        %v932 = vmul.f32 %v847, %v847
        %v933 = vmul.f32 %v853, %v853
        %v934 = vmul.f32 %v859, %v859
        %v935 = vmul.f32 %v865, %v865
        %v936 = vmul.f32 %v871, %v871
        %v937 = vmul.f32 %v877, %v877
        %938 = vmatprep.subr.mxu0 0.0
        %939 = vmatpush1.msra.mxu0 %v881
        %940 = vmatprep.subr.mxu0 0.0
        %941 = vmatpush1.msra.mxu0 %v882
        %942 = vmatprep.subr.mxu0 0.0
        %943 = vmatpush1.msra.mxu0 %v883
        %944 = vmatprep.subr.mxu0 0.0
        %945 = vmatpush1.msra.mxu0 %v884
        %946 = vmatprep.subr.mxu0 0.0
        %947 = vmatpush1.msra.mxu0 %v885
        %948 = vmatprep.subr.mxu0 0.0
        %949 = vmatpush1.msra.mxu0 %v886
        %950 = vmatprep.subr.mxu0 0.0
        %951 = vmatpush1.msra.mxu0 %v887
        %952 = vmatprep.subr.mxu0 0.0
        %953 = vmatpush1.msra.mxu0 %v888
        %954 = vmatprep.subr.mxu0 0.0
        %955 = vmatpush1.msra.mxu0 %v889
        %956 = vmatprep.subr.mxu0 0.0
        %957 = vmatpush1.msra.mxu0 %v890
        %958 = vmatprep.subr.mxu0 0.0
        %959 = vmatpush1.msra.mxu0 %v891
        %960 = vmatprep.subr.mxu0 0.0
        %961 = vmatpush1.msra.mxu0 %v892
        %962 = vmatprep.subr.mxu0 0.0
        %963 = vmatpush1.msra.mxu0 %v893
        %964 = vmatprep.subr.mxu0 0.0
        %965 = vmatpush1.msra.mxu0 %v894
        %966 = vmatprep.subr.mxu0 0.0
        %967 = vmatpush1.msra.mxu0 %v895
        %968 = vmatprep.subr.mxu0 0.0
        %969 = vmatpush1.msra.mxu0 %v896
        %970 = vmatprep.subr.mxu0 0.0
        %971 = vmatpush1.msra.mxu0 0.0
        %972 = vmatprep.subr.mxu0 0.0
        %973 = vmatpush1.msra.mxu0 0.0
        %974 = vmatprep.subr.mxu0 0.0
        %975 = vmatpush1.msra.mxu0 0.0
        %976 = vmatprep.subr.mxu0 0.0
        %977 = vmatpush1.msra.mxu0 0.0
        %978 = vmatprep.subr.mxu0 0.0
        %979 = vmatpush1.msra.mxu0 0.0
        %980 = vmatprep.subr.mxu0 0.0
        %981 = vmatpush1.msra.mxu0 0.0
        %982 = vmatprep.subr.mxu0 0.0
        %983 = vmatpush1.msra.mxu0 0.0
        %984 = vmatprep.subr.mxu0 0.0
        %985 = vmatpush1.msra.mxu0 0.0
        %986 = vmatprep.subr.mxu0 0.0
        %987 = vmatpush1.msra.mxu0 0.0
        %988 = vmatprep.subr.mxu0 0.0
        %989 = vmatpush1.msra.mxu0 0.0
        %990 = vmatprep.subr.mxu0 0.0
        %991 = vmatpush1.msra.mxu0 0.0
        %992 = vmatprep.subr.mxu0 0.0
        %993 = vmatpush1.msra.mxu0 0.0
        %994 = vmatprep.subr.mxu0 0.0
        %995 = vmatpush1.msra.mxu0 0.0
        %996 = vmatprep.subr.mxu0 0.0
        %997 = vmatpush1.msra.mxu0 0.0
        %998 = vmatprep.subr.mxu0 0.0
        %999 = vmatpush1.msra.mxu0 0.0
        %1000 = vmatprep.subr.mxu0 0.0
        %1001 = vmatpush1.msra.mxu0 0.0
        %1002 = vmatprep.mubr.f32.mxu0 0.0
        %1003 = vmatmul.mubr.f32.gmra.mrb[0].mxu0 %v930
        %v1004 = vpop.f32.mrb[0].mxu0
        %v1005 = vadd.f32 1e-06, %v1004
        %v1006 = vpop.f32.mrb[0].mxu0
        %1007 = vmatprep.mubr.f32.mxu0 0.0
        %1008 = vmatmul.mubr.f32.gmra.mrb[0].mxu0 %v931
        %v1009 = vpop.f32.mrb[0].mxu0
        %v1010 = vadd.f32 1e-06, %v1009
        %v1011 = vpop.f32.mrb[0].mxu0
        %1012 = vmatprep.mubr.f32.mxu0 0.0
        %1013 = vmatmul.mubr.f32.gmra.mrb[0].mxu0 %v932
        %v1014 = vpop.f32.mrb[0].mxu0
        %v1015 = vadd.f32 1e-06, %v1014
        %v1016 = vpop.f32.mrb[0].mxu0
        %1017 = vmatprep.mubr.f32.mxu0 0.0
        %1018 = vmatmul.mubr.f32.gmra.mrb[0].mxu0 %v933
        %v1019 = vpop.f32.mrb[0].mxu0
        %v1020 = vadd.f32 1e-06, %v1019
        %v1021 = vpop.f32.mrb[0].mxu0
        %1022 = vmatprep.mubr.f32.mxu0 0.0
        %1023 = vmatmul.mubr.f32.gmra.mrb[0].mxu0 %v934
        %v1024 = vpop.f32.mrb[0].mxu0
        %v1025 = vadd.f32 1e-06, %v1024
        %v1026 = vpop.f32.mrb[0].mxu0
        %1027 = vmatprep.mubr.f32.mxu0 0.0
        %1028 = vmatmul.mubr.f32.gmra.mrb[0].mxu0 %v935
        %v1029 = vpop.f32.mrb[0].mxu0
        %v1030 = vadd.f32 1e-06, %v1029
        %v1031 = vpop.f32.mrb[0].mxu0
        %1032 = vmatprep.mubr.f32.mxu0 0.0
        %1033 = vmatmul.mubr.f32.gmra.mrb[0].mxu0 %v936
        %v1034 = vpop.f32.mrb[0].mxu0
        %v1035 = vadd.f32 1e-06, %v1034
        %v1036 = vpop.f32.mrb[0].mxu0
        %1037 = vmatprep.mubr.f32.mxu0 0.0
        %1038 = vmatmul.mubr.f32.gmra.mrb[0].mxu0 %v937
        %v1039 = vpop.f32.mrb[0].mxu0
        %v1040 = vadd.f32 1e-06, %v1039
        %v1041 = vpop.f32.mrb[0].mxu0
        %1042 = vdwg.mxu0
        %v1043 = vrsqrt.pop %v1005
        %v1044 = vrsqrt.pop %v1010
        %v1045 = vrsqrt.pop %v1015
        %v1046 = vrsqrt.pop %v1020
        %v1047 = vrsqrt.pop %v1025
        %v1048 = vrsqrt.pop %v1030
        %v1049 = vrsqrt.pop %v1035
        %v1050 = vrsqrt.pop %v1040
        %v1051 = vmul.f32 %v835, %v1043
        %v1052 = vmul.f32 %v841, %v1044
        %v1053 = vmul.f32 %v847, %v1045
        %v1054 = vmul.f32 %v853, %v1046
        %v1055 = vmul.f32 %v859, %v1047
        %v1056 = vmul.f32 %v865, %v1048
        %v1057 = vmul.f32 %v871, %v1049
        %v1058 = vmul.f32 %v877, %v1050
        %v1060 = vlaneseq
        %v1061 = vshrl.u32 %v1060, 7
        %v1062 = vsub.s32 0, %v1061
        %v1063 = vrot.slane %v897, %v1062
        %v1065 = vmul.f32 %v1051, %v1063
        %v1066 = vmul.f32 %v1052, %v1063
        %v1067 = vmul.f32 %v1053, %v1063
        %v1068 = vmul.f32 %v1054, %v1063
        %v1069 = vmul.f32 %v1055, %v1063
        %v1070 = vmul.f32 %v1056, %v1063
        %v1071 = vmul.f32 %v1057, %v1063
        %v1072 = vmul.f32 %v1058, %v1063
        %1073 = vmatprep.subr.mxu0 0.0
        %1074 = vmatpush1.msra.mxu0 %v898
        %1075 = vmatprep.subr.mxu0 0.0
        %1076 = vmatpush1.msra.mxu0 %v899
        %1077 = vmatprep.subr.mxu0 0.0
        %1078 = vmatpush1.msra.mxu0 %v900
        %1079 = vmatprep.subr.mxu0 0.0
        %1080 = vmatpush1.msra.mxu0 %v901
        %1081 = vmatprep.subr.mxu0 0.0
        %1082 = vmatpush1.msra.mxu0 %v902
        %1083 = vmatprep.subr.mxu0 0.0
        %1084 = vmatpush1.msra.mxu0 %v903
        %1085 = vmatprep.subr.mxu0 0.0
        %1086 = vmatpush1.msra.mxu0 %v904
        %1087 = vmatprep.subr.mxu0 0.0
        %1088 = vmatpush1.msra.mxu0 %v905
        %1089 = vmatprep.subr.mxu0 0.0
        %1090 = vmatpush1.msra.mxu0 %v906
        %1091 = vmatprep.subr.mxu0 0.0
        %1092 = vmatpush1.msra.mxu0 %v907
        %1093 = vmatprep.subr.mxu0 0.0
        %1094 = vmatpush1.msra.mxu0 %v908
        %1095 = vmatprep.subr.mxu0 0.0
        %1096 = vmatpush1.msra.mxu0 %v909
        %1097 = vmatprep.subr.mxu0 0.0
        %1098 = vmatpush1.msra.mxu0 %v910
        %1099 = vmatprep.subr.mxu0 0.0
        %1100 = vmatpush1.msra.mxu0 %v911
        %1101 = vmatprep.subr.mxu0 0.0
        %1102 = vmatpush1.msra.mxu0 %v912
        %1103 = vmatprep.subr.mxu0 0.0
        %1104 = vmatpush1.msra.mxu0 %v913
        %1105 = vmatprep.subr.mxu0 0.0
        %1106 = vmatpush1.msra.mxu0 0.0
        %1107 = vmatprep.subr.mxu0 0.0
        %1108 = vmatpush1.msra.mxu0 0.0
        %1109 = vmatprep.subr.mxu0 0.0
        %1110 = vmatpush1.msra.mxu0 0.0
        %1111 = vmatprep.subr.mxu0 0.0
        %1112 = vmatpush1.msra.mxu0 0.0
        %1113 = vmatprep.subr.mxu0 0.0
        %1114 = vmatpush1.msra.mxu0 0.0
        %1115 = vmatprep.subr.mxu0 0.0
        %1116 = vmatpush1.msra.mxu0 0.0
        %1117 = vmatprep.subr.mxu0 0.0
        %1118 = vmatpush1.msra.mxu0 0.0
        %1119 = vmatprep.subr.mxu0 0.0
        %1120 = vmatpush1.msra.mxu0 0.0
        %1121 = vmatprep.subr.mxu0 0.0
        %1122 = vmatpush1.msra.mxu0 0.0
        %1123 = vmatprep.subr.mxu0 0.0
        %1124 = vmatpush1.msra.mxu0 0.0
        %1125 = vmatprep.subr.mxu0 0.0
        %1126 = vmatpush1.msra.mxu0 0.0
        %1127 = vmatprep.subr.mxu0 0.0
        %1128 = vmatpush1.msra.mxu0 0.0
        %1129 = vmatprep.subr.mxu0 0.0
        %1130 = vmatpush1.msra.mxu0 0.0
        %1131 = vmatprep.subr.mxu0 0.0
        %1132 = vmatpush1.msra.mxu0 0.0
        %1133 = vmatprep.subr.mxu0 0.0
        %1134 = vmatpush1.msra.mxu0 0.0
        %1135 = vmatprep.subr.mxu0 0.0
        %1136 = vmatpush1.msra.mxu0 0.0
        %1137 = vmatprep.mubr.f32.mxu0 0.0
        %1138 = vmatmul.mubr.f32.gmra.mrb[0].mxu0 %v1065
        %v1139 = vpop.f32.mrb[0].mxu0
        %v1140 = vadd.f32 0.0, %v1139
        %v1141 = vpop.f32.mrb[0].mxu0
        %1142 = vmatprep.mubr.f32.mxu0 0.0
        %1143 = vmatmul.mubr.f32.gmra.mrb[0].mxu0 %v1066
        %v1144 = vpop.f32.mrb[0].mxu0
        %v1145 = vadd.f32 0.0, %v1144
        %v1146 = vpop.f32.mrb[0].mxu0
        %1147 = vmatprep.mubr.f32.mxu0 0.0
        %1148 = vmatmul.mubr.f32.gmra.mrb[0].mxu0 %v1067
        %v1149 = vpop.f32.mrb[0].mxu0
        %v1150 = vadd.f32 0.0, %v1149
        %v1151 = vpop.f32.mrb[0].mxu0
        %1152 = vmatprep.mubr.f32.mxu0 0.0
        %1153 = vmatmul.mubr.f32.gmra.mrb[0].mxu0 %v1068
        %v1154 = vpop.f32.mrb[0].mxu0
        %v1155 = vadd.f32 0.0, %v1154
        %v1156 = vpop.f32.mrb[0].mxu0
        %1157 = vmatprep.mubr.f32.mxu0 0.0
        %1158 = vmatmul.mubr.f32.gmra.mrb[0].mxu0 %v1069
        %v1159 = vpop.f32.mrb[0].mxu0
        %v1160 = vadd.f32 0.0, %v1159
        %v1161 = vpop.f32.mrb[0].mxu0
        %1162 = vmatprep.mubr.f32.mxu0 0.0
        %1163 = vmatmul.mubr.f32.gmra.mrb[0].mxu0 %v1070
        %v1164 = vpop.f32.mrb[0].mxu0
        %v1165 = vadd.f32 0.0, %v1164
        %v1166 = vpop.f32.mrb[0].mxu0
        %1167 = vmatprep.mubr.f32.mxu0 0.0
        %1168 = vmatmul.mubr.f32.gmra.mrb[0].mxu0 %v1071
        %v1169 = vpop.f32.mrb[0].mxu0
        %v1170 = vadd.f32 0.0, %v1169
        %v1171 = vpop.f32.mrb[0].mxu0
        %1172 = vmatprep.mubr.f32.mxu0 0.0
        %1173 = vmatmul.mubr.f32.gmra.mrb[0].mxu0 %v1072
        %v1174 = vpop.f32.mrb[0].mxu0
        %v1175 = vadd.f32 0.0, %v1174
        %v1176 = vpop.f32.mrb[0].mxu0
        %1177 = vdwg.mxu0
        %v1178 = vmul.f32 %v1065, %v914
        %v1179 = vmul.f32 %v1066, %v915
        %v1180 = vmul.f32 %v1067, %v916
        %v1181 = vmul.f32 %v1068, %v917
        %v1182 = vmul.f32 %v1069, %v918
        %v1183 = vmul.f32 %v1070, %v919
        %v1184 = vmul.f32 %v1071, %v920
        %v1185 = vmul.f32 %v1072, %v921
        %v1186 = vmul.f32 %v1140, %v922
        %v1187 = vmul.f32 %v1145, %v923
        %v1188 = vmul.f32 %v1150, %v924
        %v1189 = vmul.f32 %v1155, %v925
        %v1190 = vmul.f32 %v1160, %v926
        %v1191 = vmul.f32 %v1165, %v927
        %v1192 = vmul.f32 %v1170, %v928
        %v1193 = vmul.f32 %v1175, %v929
        %v1194 = vadd.f32 %v1178, %v1186
        %v1195 = vadd.f32 %v1179, %v1187
        %v1196 = vadd.f32 %v1180, %v1188
        %v1197 = vadd.f32 %v1181, %v1189
        %v1198 = vadd.f32 %v1182, %v1190
        %v1199 = vadd.f32 %v1183, %v1191
        %v1200 = vadd.f32 %v1184, %v1192
        %v1201 = vadd.f32 %v1185, %v1193
        %v1202 = vld [vmem:[#allocation11] sm:$0xff]
        %v1203 = vld [vmem:[#allocation11 + $0x8] sm:$0xff]
        %v1204 = vld [vmem:[#allocation11 + $0x10] sm:$0xff]
        %v1205 = vld [vmem:[#allocation11 + $0x18] sm:$0xff]
        %v1206 = vld [vmem:[#allocation11 + $0x20] sm:$0xff]
        %v1207 = vld [vmem:[#allocation11 + $0x28] sm:$0xff]
        %v1208 = vld [vmem:[#allocation11 + $0x30] sm:$0xff]
        %v1209 = vld [vmem:[#allocation11 + $0x38] sm:$0xff]
        %v1210 = vld [vmem:[%s11] sm:$0x1]
        %v1211 = vld [vmem:[#allocation8] sm:$0xff]
        %v1212 = vld [vmem:[#allocation8 + $0x8] sm:$0xff]
        %v1213 = vld [vmem:[#allocation8 + $0x10] sm:$0xff]
        %v1214 = vld [vmem:[#allocation8 + $0x18] sm:$0xff]
        %v1215 = vld [vmem:[#allocation8 + $0x20] sm:$0xff]
        %v1216 = vld [vmem:[#allocation8 + $0x28] sm:$0xff]
        %v1217 = vld [vmem:[#allocation8 + $0x30] sm:$0xff]
        %v1218 = vld [vmem:[#allocation8 + $0x38] sm:$0xff]
        %v1219 = vld [vmem:[%s699] sm:$0xff]
        %v1220 = vld [vmem:[%s699 + $0x8] sm:$0xff]
        %v1221 = vld [vmem:[%s699 + $0x10] sm:$0xff]
        %v1222 = vld [vmem:[%s699 + $0x18] sm:$0xff]
        %v1223 = vld [vmem:[%s699 + $0x20] sm:$0xff]
        %v1224 = vld [vmem:[%s699 + $0x28] sm:$0xff]
        %v1225 = vld [vmem:[%s699 + $0x30] sm:$0xff]
        %v1226 = vld [vmem:[%s699 + $0x38] sm:$0xff]
        %v1227 = vld [vmem:[%s705] sm:$0xff]
        %v1228 = vld [vmem:[%s705 + $0x8] sm:$0xff]
        %v1229 = vld [vmem:[%s705 + $0x10] sm:$0xff]
        %v1230 = vld [vmem:[%s705 + $0x18] sm:$0xff]
        %v1231 = vld [vmem:[%s705 + $0x20] sm:$0xff]
        %v1232 = vld [vmem:[%s705 + $0x28] sm:$0xff]
        %v1233 = vld [vmem:[%s705 + $0x30] sm:$0xff]
        %v1234 = vld [vmem:[%s705 + $0x38] sm:$0xff]
        %v1235 = vmul.f32 %v837, %v837
        %v1236 = vmul.f32 %v843, %v843
        %v1237 = vmul.f32 %v849, %v849
        %v1238 = vmul.f32 %v855, %v855
        %v1239 = vmul.f32 %v861, %v861
        %v1240 = vmul.f32 %v867, %v867
        %v1241 = vmul.f32 %v873, %v873
        %v1242 = vmul.f32 %v879, %v879
        %vm1243 = vcmask 523264
        %v1245 = vsel %vm1243, %v1235, 0
        %v1248 = vsel %vm1243, %v1236, 0
        %v1251 = vsel %vm1243, %v1237, 0
        %v1254 = vsel %vm1243, %v1238, 0
        %v1257 = vsel %vm1243, %v1239, 0
        %v1260 = vsel %vm1243, %v1240, 0
        %v1263 = vsel %vm1243, %v1241, 0
        %v1266 = vsel %vm1243, %v1242, 0
        %1268 = vmatprep.subr.mxu0 0.0
        %1269 = vmatpush1.msra.mxu0 %v1202
        %1270 = vmatprep.subr.mxu0 0.0
        %1271 = vmatpush1.msra.mxu0 %v1203
        %1272 = vmatprep.subr.mxu0 0.0
        %1273 = vmatpush1.msra.mxu0 %v1204
        %1274 = vmatprep.subr.mxu0 0.0
        %1275 = vmatpush1.msra.mxu0 %v1205
        %1276 = vmatprep.subr.mxu0 0.0
        %1277 = vmatpush1.msra.mxu0 %v1206
        %1278 = vmatprep.subr.mxu0 0.0
        %1279 = vmatpush1.msra.mxu0 %v1207
        %1280 = vmatprep.subr.mxu0 0.0
        %1281 = vmatpush1.msra.mxu0 %v1208
        %1282 = vmatprep.subr.mxu0 0.0
        %1283 = vmatpush1.msra.mxu0 %v1209
        %1284 = vmatprep.subr.mxu0 0.0
        %1285 = vmatpush1.msra.mxu0 0.0
        %1286 = vmatprep.subr.mxu0 0.0
        %1287 = vmatpush1.msra.mxu0 0.0
        %1288 = vmatprep.subr.mxu0 0.0
        %1289 = vmatpush1.msra.mxu0 0.0
        %1290 = vmatprep.subr.mxu0 0.0
        %1291 = vmatpush1.msra.mxu0 0.0
        %1292 = vmatprep.subr.mxu0 0.0
        %1293 = vmatpush1.msra.mxu0 0.0
        %1294 = vmatprep.subr.mxu0 0.0
        %1295 = vmatpush1.msra.mxu0 0.0
        %1296 = vmatprep.subr.mxu0 0.0
        %1297 = vmatpush1.msra.mxu0 0.0
        %1298 = vmatprep.subr.mxu0 0.0
        %1299 = vmatpush1.msra.mxu0 0.0
        %1300 = vmatprep.subr.mxu0 0.0
        %1301 = vmatpush1.msra.mxu0 0.0
        %1302 = vmatprep.subr.mxu0 0.0
        %1303 = vmatpush1.msra.mxu0 0.0
        %1304 = vmatprep.subr.mxu0 0.0
        %1305 = vmatpush1.msra.mxu0 0.0
        %1306 = vmatprep.subr.mxu0 0.0
        %1307 = vmatpush1.msra.mxu0 0.0
        %1308 = vmatprep.subr.mxu0 0.0
        %1309 = vmatpush1.msra.mxu0 0.0
        %1310 = vmatprep.subr.mxu0 0.0
        %1311 = vmatpush1.msra.mxu0 0.0
        %1312 = vmatprep.subr.mxu0 0.0
        %1313 = vmatpush1.msra.mxu0 0.0
        %1314 = vmatprep.subr.mxu0 0.0
        %1315 = vmatpush1.msra.mxu0 0.0
        %1316 = vmatprep.subr.mxu0 0.0
        %1317 = vmatpush1.msra.mxu0 0.0
        %1318 = vmatprep.subr.mxu0 0.0
        %1319 = vmatpush1.msra.mxu0 0.0
        %1320 = vmatprep.subr.mxu0 0.0
        %1321 = vmatpush1.msra.mxu0 0.0
        %1322 = vmatprep.subr.mxu0 0.0
        %1323 = vmatpush1.msra.mxu0 0.0
        %1324 = vmatprep.subr.mxu0 0.0
        %1325 = vmatpush1.msra.mxu0 0.0
        %1326 = vmatprep.subr.mxu0 0.0
        %1327 = vmatpush1.msra.mxu0 0.0
        %1328 = vmatprep.subr.mxu0 0.0
        %1329 = vmatpush1.msra.mxu0 0.0
        %1330 = vmatprep.subr.mxu0 0.0
        %1331 = vmatpush1.msra.mxu0 0.0
        %1332 = vmatprep.mubr.f32.mxu0 0.0
        %1333 = vmatmul.mubr.f32.gmra.mrb[0].mxu0 %v1245
        %v1334 = vpop.f32.mrb[0].mxu0
        %v1335 = vadd.f32 1e-06, %v1334
        %v1336 = vpop.f32.mrb[0].mxu0
        %1337 = vmatprep.mubr.f32.mxu0 0.0
        %1338 = vmatmul.mubr.f32.gmra.mrb[0].mxu0 %v1248
        %v1339 = vpop.f32.mrb[0].mxu0
        %v1340 = vadd.f32 1e-06, %v1339
        %v1341 = vpop.f32.mrb[0].mxu0
        %1342 = vmatprep.mubr.f32.mxu0 0.0
        %1343 = vmatmul.mubr.f32.gmra.mrb[0].mxu0 %v1251
        %v1344 = vpop.f32.mrb[0].mxu0
        %v1345 = vadd.f32 1e-06, %v1344
        %v1346 = vpop.f32.mrb[0].mxu0
        %1347 = vmatprep.mubr.f32.mxu0 0.0
        %1348 = vmatmul.mubr.f32.gmra.mrb[0].mxu0 %v1254
        %v1349 = vpop.f32.mrb[0].mxu0
        %v1350 = vadd.f32 1e-06, %v1349
        %v1351 = vpop.f32.mrb[0].mxu0
        %1352 = vmatprep.mubr.f32.mxu0 0.0
        %1353 = vmatmul.mubr.f32.gmra.mrb[0].mxu0 %v1257
        %v1354 = vpop.f32.mrb[0].mxu0
        %v1355 = vadd.f32 1e-06, %v1354
        %v1356 = vpop.f32.mrb[0].mxu0
        %1357 = vmatprep.mubr.f32.mxu0 0.0
        %1358 = vmatmul.mubr.f32.gmra.mrb[0].mxu0 %v1260
        %v1359 = vpop.f32.mrb[0].mxu0
        %v1360 = vadd.f32 1e-06, %v1359
        %v1361 = vpop.f32.mrb[0].mxu0
        %1362 = vmatprep.mubr.f32.mxu0 0.0
        %1363 = vmatmul.mubr.f32.gmra.mrb[0].mxu0 %v1263
        %v1364 = vpop.f32.mrb[0].mxu0
        %v1365 = vadd.f32 1e-06, %v1364
        %v1366 = vpop.f32.mrb[0].mxu0
        %1367 = vmatprep.mubr.f32.mxu0 0.0
        %1368 = vmatmul.mubr.f32.gmra.mrb[0].mxu0 %v1266
        %v1369 = vpop.f32.mrb[0].mxu0
        %v1370 = vadd.f32 1e-06, %v1369
        %v1371 = vpop.f32.mrb[0].mxu0
        %1372 = vdwg.mxu0
        %v1373 = vrsqrt.pop %v1335
        %v1374 = vrsqrt.pop %v1340
        %v1375 = vrsqrt.pop %v1345
        %v1376 = vrsqrt.pop %v1350
        %v1377 = vrsqrt.pop %v1355
        %v1378 = vrsqrt.pop %v1360
        %v1379 = vrsqrt.pop %v1365
        %v1380 = vrsqrt.pop %v1370
        %v1381 = vmul.f32 %v837, %v1373
        %v1382 = vmul.f32 %v843, %v1374
        %v1383 = vmul.f32 %v849, %v1375
        %v1384 = vmul.f32 %v855, %v1376
        %v1385 = vmul.f32 %v861, %v1377
        %v1386 = vmul.f32 %v867, %v1378
        %v1387 = vmul.f32 %v873, %v1379
        %v1388 = vmul.f32 %v879, %v1380
        %v1390 = vlaneseq
        %v1391 = vshrl.u32 %v1390, 7
        %v1392 = vsub.s32 0, %v1391
        %v1393 = vrot.slane %v1210, %v1392
        %v1395 = vmul.f32 %v1381, %v1393
        %v1396 = vmul.f32 %v1382, %v1393
        %v1397 = vmul.f32 %v1383, %v1393
        %v1398 = vmul.f32 %v1384, %v1393
        %v1399 = vmul.f32 %v1385, %v1393
        %v1400 = vmul.f32 %v1386, %v1393
        %v1401 = vmul.f32 %v1387, %v1393
        %v1402 = vmul.f32 %v1388, %v1393
        %v1404 = vsel %vm1243, %v1395, 0
        %v1407 = vsel %vm1243, %v1396, 0
        %v1410 = vsel %vm1243, %v1397, 0
        %v1413 = vsel %vm1243, %v1398, 0
        %v1416 = vsel %vm1243, %v1399, 0
        %v1419 = vsel %vm1243, %v1400, 0
        %v1422 = vsel %vm1243, %v1401, 0
        %v1425 = vsel %vm1243, %v1402, 0
        %1427 = vmatprep.subr.mxu0 0.0
        %1428 = vmatpush1.msra.mxu0 %v1211
        %1429 = vmatprep.subr.mxu0 0.0
        %1430 = vmatpush1.msra.mxu0 %v1212
        %1431 = vmatprep.subr.mxu0 0.0
        %1432 = vmatpush1.msra.mxu0 %v1213
        %1433 = vmatprep.subr.mxu0 0.0
        %1434 = vmatpush1.msra.mxu0 %v1214
        %1435 = vmatprep.subr.mxu0 0.0
        %1436 = vmatpush1.msra.mxu0 %v1215
        %1437 = vmatprep.subr.mxu0 0.0
        %1438 = vmatpush1.msra.mxu0 %v1216
        %1439 = vmatprep.subr.mxu0 0.0
        %1440 = vmatpush1.msra.mxu0 %v1217
        %1441 = vmatprep.subr.mxu0 0.0
        %1442 = vmatpush1.msra.mxu0 %v1218
        %1443 = vmatprep.subr.mxu0 0.0
        %1444 = vmatpush1.msra.mxu0 0.0
        %1445 = vmatprep.subr.mxu0 0.0
        %1446 = vmatpush1.msra.mxu0 0.0
        %1447 = vmatprep.subr.mxu0 0.0
        %1448 = vmatpush1.msra.mxu0 0.0
        %1449 = vmatprep.subr.mxu0 0.0
        %1450 = vmatpush1.msra.mxu0 0.0
        %1451 = vmatprep.subr.mxu0 0.0
        %1452 = vmatpush1.msra.mxu0 0.0
        %1453 = vmatprep.subr.mxu0 0.0
        %1454 = vmatpush1.msra.mxu0 0.0
        %1455 = vmatprep.subr.mxu0 0.0
        %1456 = vmatpush1.msra.mxu0 0.0
        %1457 = vmatprep.subr.mxu0 0.0
        %1458 = vmatpush1.msra.mxu0 0.0
        %1459 = vmatprep.subr.mxu0 0.0
        %1460 = vmatpush1.msra.mxu0 0.0
        %1461 = vmatprep.subr.mxu0 0.0
        %1462 = vmatpush1.msra.mxu0 0.0
        %1463 = vmatprep.subr.mxu0 0.0
        %1464 = vmatpush1.msra.mxu0 0.0
        %1465 = vmatprep.subr.mxu0 0.0
        %1466 = vmatpush1.msra.mxu0 0.0
        %1467 = vmatprep.subr.mxu0 0.0
        %1468 = vmatpush1.msra.mxu0 0.0
        %1469 = vmatprep.subr.mxu0 0.0
        %1470 = vmatpush1.msra.mxu0 0.0
        %1471 = vmatprep.subr.mxu0 0.0
        %1472 = vmatpush1.msra.mxu0 0.0
        %1473 = vmatprep.subr.mxu0 0.0
        %1474 = vmatpush1.msra.mxu0 0.0
        %1475 = vmatprep.subr.mxu0 0.0
        %1476 = vmatpush1.msra.mxu0 0.0
        %1477 = vmatprep.subr.mxu0 0.0
        %1478 = vmatpush1.msra.mxu0 0.0
        %1479 = vmatprep.subr.mxu0 0.0
        %1480 = vmatpush1.msra.mxu0 0.0
        %1481 = vmatprep.subr.mxu0 0.0
        %1482 = vmatpush1.msra.mxu0 0.0
        %1483 = vmatprep.subr.mxu0 0.0
        %1484 = vmatpush1.msra.mxu0 0.0
        %1485 = vmatprep.subr.mxu0 0.0
        %1486 = vmatpush1.msra.mxu0 0.0
        %1487 = vmatprep.subr.mxu0 0.0
        %1488 = vmatpush1.msra.mxu0 0.0
        %1489 = vmatprep.subr.mxu0 0.0
        %1490 = vmatpush1.msra.mxu0 0.0
        %1491 = vmatprep.mubr.f32.mxu0 0.0
        %1492 = vmatmul.mubr.f32.gmra.mrb[0].mxu0 %v1404
        %v1493 = vpop.f32.mrb[0].mxu0
        %v1494 = vadd.f32 0.0, %v1493
        %v1495 = vpop.f32.mrb[0].mxu0
        %1496 = vmatprep.mubr.f32.mxu0 0.0
        %1497 = vmatmul.mubr.f32.gmra.mrb[0].mxu0 %v1407
        %v1498 = vpop.f32.mrb[0].mxu0
        %v1499 = vadd.f32 0.0, %v1498
        %v1500 = vpop.f32.mrb[0].mxu0
        %1501 = vmatprep.mubr.f32.mxu0 0.0
        %1502 = vmatmul.mubr.f32.gmra.mrb[0].mxu0 %v1410
        %v1503 = vpop.f32.mrb[0].mxu0
        %v1504 = vadd.f32 0.0, %v1503
        %v1505 = vpop.f32.mrb[0].mxu0
        %1506 = vmatprep.mubr.f32.mxu0 0.0
        %1507 = vmatmul.mubr.f32.gmra.mrb[0].mxu0 %v1413
        %v1508 = vpop.f32.mrb[0].mxu0
        %v1509 = vadd.f32 0.0, %v1508
        %v1510 = vpop.f32.mrb[0].mxu0
        %1511 = vmatprep.mubr.f32.mxu0 0.0
        %1512 = vmatmul.mubr.f32.gmra.mrb[0].mxu0 %v1416
        %v1513 = vpop.f32.mrb[0].mxu0
        %v1514 = vadd.f32 0.0, %v1513
        %v1515 = vpop.f32.mrb[0].mxu0
        %1516 = vmatprep.mubr.f32.mxu0 0.0
        %1517 = vmatmul.mubr.f32.gmra.mrb[0].mxu0 %v1419
        %v1518 = vpop.f32.mrb[0].mxu0
        %v1519 = vadd.f32 0.0, %v1518
        %v1520 = vpop.f32.mrb[0].mxu0
        %1521 = vmatprep.mubr.f32.mxu0 0.0
        %1522 = vmatmul.mubr.f32.gmra.mrb[0].mxu0 %v1422
        %v1523 = vpop.f32.mrb[0].mxu0
        %v1524 = vadd.f32 0.0, %v1523
        %v1525 = vpop.f32.mrb[0].mxu0
        %1526 = vmatprep.mubr.f32.mxu0 0.0
        %1527 = vmatmul.mubr.f32.gmra.mrb[0].mxu0 %v1425
        %v1528 = vpop.f32.mrb[0].mxu0
        %v1529 = vadd.f32 0.0, %v1528
        %v1530 = vpop.f32.mrb[0].mxu0
        %1531 = vdwg.mxu0
        %v1532 = vmul.f32 %v1395, %v1219
        %v1533 = vmul.f32 %v1396, %v1220
        %v1534 = vmul.f32 %v1397, %v1221
        %v1535 = vmul.f32 %v1398, %v1222
        %v1536 = vmul.f32 %v1399, %v1223
        %v1537 = vmul.f32 %v1400, %v1224
        %v1538 = vmul.f32 %v1401, %v1225
        %v1539 = vmul.f32 %v1402, %v1226
        %v1540 = vmul.f32 %v1494, %v1227
        %v1541 = vmul.f32 %v1499, %v1228
        %v1542 = vmul.f32 %v1504, %v1229
        %v1543 = vmul.f32 %v1509, %v1230
        %v1544 = vmul.f32 %v1514, %v1231
        %v1545 = vmul.f32 %v1519, %v1232
        %v1546 = vmul.f32 %v1524, %v1233
        %v1547 = vmul.f32 %v1529, %v1234
        %v1548 = vadd.f32 %v1532, %v1540
        %v1549 = vadd.f32 %v1533, %v1541
        %v1550 = vadd.f32 %v1534, %v1542
        %v1551 = vadd.f32 %v1535, %v1543
        %v1552 = vadd.f32 %v1536, %v1544
        %v1553 = vadd.f32 %v1537, %v1545
        %v1554 = vadd.f32 %v1538, %v1546
        %v1555 = vadd.f32 %v1539, %v1547
        %1556 = vst [vmem:[%s660] sm:$0xff] %v1194
        %1557 = vst [vmem:[%s660 + $0x8] sm:$0xff] %v1195
        %1558 = vst [vmem:[%s660 + $0x10] sm:$0xff] %v1196
        %1559 = vst [vmem:[%s660 + $0x18] sm:$0xff] %v1197
        %1560 = vst [vmem:[%s660 + $0x20] sm:$0xff] %v1198
        %1561 = vst [vmem:[%s660 + $0x28] sm:$0xff] %v1199
        %1562 = vst [vmem:[%s660 + $0x30] sm:$0xff] %v1200
        %1563 = vst [vmem:[%s660 + $0x38] sm:$0xff] %v1201
        %1564 = vst.msk [vmem:[%s716] sm:$0xff] %vm1243, %v1548
        %1565 = vst.msk [vmem:[%s716 + $0x8] sm:$0xff] %vm1243, %v1549
        %1566 = vst.msk [vmem:[%s716 + $0x10] sm:$0xff] %vm1243, %v1550
        %1567 = vst.msk [vmem:[%s716 + $0x18] sm:$0xff] %vm1243, %v1551
        %1568 = vst.msk [vmem:[%s716 + $0x20] sm:$0xff] %vm1243, %v1552
        %1569 = vst.msk [vmem:[%s716 + $0x28] sm:$0xff] %vm1243, %v1553
        %1570 = vst.msk [vmem:[%s716 + $0x30] sm:$0xff] %vm1243, %v1554
        %1571 = vst.msk [vmem:[%s716 + $0x38] sm:$0xff] %vm1243, %v1555
        %1580 = vrot.lane.b32.xlu0 %v837, 64
        %v1581 = vpop.permute.xlu0 %1580
        %1582 = vrot.lane.b32.xlu0 %v843, 64
        %v1583 = vpop.permute.xlu0 %1582
        %1584 = vrot.lane.b32.xlu0 %v849, 64
        %v1585 = vpop.permute.xlu0 %1584
        %1586 = vrot.lane.b32.xlu0 %v855, 64
        %v1587 = vpop.permute.xlu0 %1586
        %1588 = vrot.lane.b32.xlu0 %v861, 64
        %v1589 = vpop.permute.xlu0 %1588
        %1590 = vrot.lane.b32.xlu0 %v867, 64
        %v1591 = vpop.permute.xlu0 %1590
        %1592 = vrot.lane.b32.xlu0 %v873, 64
        %v1593 = vpop.permute.xlu0 %1592
        %1594 = vrot.lane.b32.xlu0 %v879, 64
        %v1595 = vpop.permute.xlu0 %1594
        %1604 = vst.msk [vmem:[%s726] sm:$0xff] %vm1243, %v1581
        %1605 = vst.msk [vmem:[%s726 + $0x8] sm:$0xff] %vm1243, %v1583
        %1606 = vst.msk [vmem:[%s726 + $0x10] sm:$0xff] %vm1243, %v1585
        %1607 = vst.msk [vmem:[%s726 + $0x18] sm:$0xff] %vm1243, %v1587
        %1608 = vst.msk [vmem:[%s726 + $0x20] sm:$0xff] %vm1243, %v1589
        %1609 = vst.msk [vmem:[%s726 + $0x28] sm:$0xff] %vm1243, %v1591
        %1610 = vst.msk [vmem:[%s726 + $0x30] sm:$0xff] %vm1243, %v1593
        %1611 = vst.msk [vmem:[%s726 + $0x38] sm:$0xff] %vm1243, %v1595
        %s1612 = sand.u32 %s338, 1
        %s1613 = scalar_lea.sflag [#allocation4], %s1612
        %s1614 = sand.u32 %s338, 1
        %s1615 = smul.addr %s1614, 64
        %s1616 = scalar_lea.vmem [#allocation13], %s1615
        %s1617 = smul.u32 8, %s42
        %p1618 = scmp.lt.s32.totalorder %s41, 1
        %s1619 = scalar_select %p1618, %s41, 1
        %p1620 = scmp.lt.s32.totalorder %s1617, 31
        %s1621 = scalar_select %p1620, %s1617, 31
        %s1622 = smul.addr %s1619, 32
        %s1623 = sadd.s32 %s1621, %s1622
        %s1624 = smul.addr %s1623, 8
        %s1625 = scalar_lea.vmem %s13, %s1624
        %s1626 = smul.u32 8, %s42
        %p1627 = scmp.lt.s32.totalorder %s41, 1
        %s1628 = scalar_select %p1627, %s41, 1
        %p1629 = scmp.lt.s32.totalorder %s1626, 31
        %s1630 = scalar_select %p1629, %s1626, 31
        %s1631 = smul.addr %s1628, 32
        %s1632 = sadd.s32 %s1630, %s1631
        %s1633 = smul.addr %s1632, 8
        %s1634 = scalar_lea.vmem %s14, %s1633
        // Predicated region
        $region93: #{tpu_custom_call.1} parent=67 // pred_check
          %p1635 = pneg %p348
        $region94: #{tpu_custom_call.1} parent=67 // pred_check_branch
          %1637 = sbr.rel (%p1635) target = $region96
        $region95: #{tpu_custom_call.1} parent=67 // pred_region
          %s1638 = smul.u32 8, %s42
          %s1640 = ssub.s32 1024, 1024
          %1641 = vsyncadd %s1613, %s1640
          %s1642 = smul.addr %s41, 32
          %s1643 = sadd.s32 %s1638, %s1642
          %s1644 = smul.addr %s1643, 128
          %s1645 = scalar_lea.hbm %s12, %s1644
          %s1646 = sshll.u32 %s1616, 4
          %s1647 = int_to_ptr.vmem [resolvable:$true] %s1646
          %1652 = dma.vmem_to_hbm [thread:$0]  %s1647, 1024, %s1645, %s1613, 128, 128, 8
        $region96: #{tpu_custom_call.1} parent=67 // pred_fallthru
          _
        // Predicated region
        $region97: #{tpu_custom_call.1} parent=67 // pred_check
          %p1653 = pneg %p376
        $region98: #{tpu_custom_call.1} parent=67 // pred_check_branch
          %1655 = sbr.rel (%p1653) target = $region100
        $region99: #{tpu_custom_call.1} parent=67 // pred_region
          %s1656 = smul.u32 8, %s42
        $region100: #{tpu_custom_call.1} parent=67 // pred_fallthru
          _
        // Predicated region
        $region101: #{tpu_custom_call.1} parent=67 // pred_check
          %p1657 = pneg %p404
        $region102: #{tpu_custom_call.1} parent=67 // pred_check_branch
          %1659 = sbr.rel (%p1657) target = $region104
        $region103: #{tpu_custom_call.1} parent=67 // pred_region
          %s1660 = smul.u32 8, %s42
        $region104: #{tpu_custom_call.1} parent=67 // pred_fallthru
          _
      $region68: #{tpu_custom_call.1} parent=5 // pred_fallthru
        _
      %p1661 = scmp.le.s32.totalorder 2, %s32
      // Predicated region
      $region105: #{tpu_custom_call.1} parent=5 // pred_check
        %p1662 = pneg %p1661
      $region106: #{tpu_custom_call.1} parent=5 // pred_check_branch
        %1664 = sbr.rel (%p1662) target = $region108
      $region107: #{tpu_custom_call.1} parent=5 // pred_region
        %s1665 = ssub.s32 %s32, 2
        // Predicated region
        $region109: #{tpu_custom_call.1} parent=107 // pred_check
          %p1666 = pneg %p354
        $region110: #{tpu_custom_call.1} parent=107 // pred_check_branch
          %1668 = sbr.rel (%p1666) target = $region112
        $region111: #{tpu_custom_call.1} parent=107 // pred_region
          %s1669 = sand.u32 %s339, 1
          %s1670 = scalar_lea.sflag [#allocation4], %s1669
          %s1671 = sand.u32 %s339, 1
          %s1672 = smul.addr %s1671, 64
          %s1673 = scalar_lea.vmem [#allocation13], %s1672
          %1674 = dma.done %s1670, 1024
        $region112: #{tpu_custom_call.1} parent=107 // pred_fallthru
          _
        // Predicated region
        $region113: #{tpu_custom_call.1} parent=107 // pred_check
          %p1675 = pneg %p382
        $region114: #{tpu_custom_call.1} parent=107 // pred_check_branch
          %1677 = sbr.rel (%p1675) target = $region116
        $region115: #{tpu_custom_call.1} parent=107 // pred_region
          %s1678 = smul.u32 8, %s44
          %p1679 = scmp.lt.s32.totalorder %s43, 1
          %s1680 = scalar_select %p1679, %s43, 1
          %p1681 = scmp.lt.s32.totalorder %s1678, 31
          %s1682 = scalar_select %p1681, %s1678, 31
          %s1683 = smul.addr %s1680, 32
          %s1684 = sadd.s32 %s1682, %s1683
          %s1685 = smul.addr %s1684, 8
          %s1686 = scalar_lea.vmem %s13, %s1685
        $region116: #{tpu_custom_call.1} parent=107 // pred_fallthru
          _
        // Predicated region
        $region117: #{tpu_custom_call.1} parent=107 // pred_check
          %p1687 = pneg %p410
        $region118: #{tpu_custom_call.1} parent=107 // pred_check_branch
          %1689 = sbr.rel (%p1687) target = $region120
        $region119: #{tpu_custom_call.1} parent=107 // pred_region
          %s1690 = smul.u32 8, %s44
          %p1691 = scmp.lt.s32.totalorder %s43, 1
          %s1692 = scalar_select %p1691, %s43, 1
          %p1693 = scmp.lt.s32.totalorder %s1690, 31
          %s1694 = scalar_select %p1693, %s1690, 31
          %s1695 = smul.addr %s1692, 32
          %s1696 = sadd.s32 %s1694, %s1695
          %s1697 = smul.addr %s1696, 8
          %s1698 = scalar_lea.vmem %s14, %s1697
        $region120: #{tpu_custom_call.1} parent=107 // pred_fallthru
          _
      $region108: #{tpu_custom_call.1} parent=5 // pred_fallthru
        _
    $region6: #{tpu_custom_call.1} parent=1 // loop_footer
      %s36 = sadd.s32 1, %s32
    $region7: #{tpu_custom_call.1} parent=1 // loop_footer_branch
      %31 = sbr.rel target = $region3
    $region8: #{tpu_custom_call.1} parent=1 // loop_exit
      _
    %1699 = vsyncpa [#allocation3], 1
    %s1700 = scalar_lea.sflag [#allocation3], 1
    %1701 = vsyncpa %s1700, 1
    %1702 = vsyncpa [#allocation6], 1
    %s1703 = scalar_lea.sflag [#allocation6], 1
    %1704 = vsyncpa %s1703, 1
    %1705 = vsyncpa [#allocation9], 1
    %1706 = vsyncpa [#allocation12], 1
    %1707 = vsyncpa [#allocation4], 1
    %s1708 = scalar_lea.sflag [#allocation4], 1
    %1709 = vsyncpa %s1708, 1

</llo_original>
